<compile_context>
chip_gen: v7x
topology: tpu7x:2x2x1
jax: 0.10.0
libtpu: 0.0.40
codegen_flags: <defaults>
</compile_context>

<pallas_src>
import functools

import jax
import jax.numpy as jnp
from jax.experimental import pallas as pl
from jax.experimental.pallas import tpu as pltpu

H1 = 512
H2 = 256
AUG = 16          # augmented input rows: [x_0..x_{S-1}, 1 (bias), zero padding]


def _round_up(v, m):
    return ((v + m - 1) // m) * m


def _tpu_generation():
    try:
        kind = jax.devices()[0].device_kind.lower()
    except Exception:
        return "unknown"
    if "v5 lite" in kind or "v5lite" in kind or "v5e" in kind:
        return "v5e"
    if "v6" in kind:
        return "v6e"
    if "v7" in kind:
        return "v7x"
    return "unknown"


# Generation-aware defaults: batch tile, scoped-VMEM limit, whether layer 1
# runs on the MXU, and whether to force >= 2 grid steps (v7x has 2 TCs).
_GEN_CONFIG = {
    "v5e":     dict(tile_b=2048, vmem=32 * 1024 * 1024, mxu_l1=False, split=False),
    "v6e":     dict(tile_b=4096, vmem=48 * 1024 * 1024, mxu_l1=True,  split=False),
    "v7x":     dict(tile_b=4096, vmem=48 * 1024 * 1024, mxu_l1=True,  split=True),
    "unknown": dict(tile_b=2048, vmem=32 * 1024 * 1024, mxu_l1=True,  split=False),
}


def valuenet_kernel(x_ref, w1_ref, w2_ref, b2_ref, w3_ref, b3_ref, o_ref,
                    *, n_in, mxu_l1):
    """Feature-major fused MLP.
       x (AUG, TB) bf16, w1_aug (H1, AUG) bf16, w2 (H2, H1) bf16, b2 (H2, 1) f32,
       w3 (1, H2) bf16, b3 (1, 1) f32, out (1, TB) f32."""
    x = x_ref[...]                                             # (AUG, TB) bf16

    if mxu_l1:
        # Layer 1 (+ bias folded into the augmented weight) as one MXU matmul.
        h1 = jnp.dot(w1_ref[...], x, preferred_element_type=jnp.float32)
    else:
        # v5e: MXU is the binding unit there -> keep layer 1 on the VPU as
        # broadcast FMAs over the n_in = S+1 used rows (incl. the ones/bias row).
        w1 = w1_ref[...].astype(jnp.float32)                   # (H1, AUG)
        xf = x.astype(jnp.float32)                             # (AUG, TB)
        h1 = w1[:, 0:1] * xf[0:1, :]
        for d in range(1, n_in):
            h1 = h1 + w1[:, d:d + 1] * xf[d:d + 1, :]
    h1 = jnp.maximum(h1, 0.0).astype(jnp.bfloat16)             # (H1, TB)

    # Layer 2: plain MXU matmul (f32 accumulate), bias + ReLU on the VPU.
    h2 = jnp.dot(w2_ref[...], h1, preferred_element_type=jnp.float32)
    h2 = jnp.maximum(h2 + b2_ref[...], 0.0).astype(jnp.bfloat16)   # (H2, TB)

    # Layer 3: (1, H2) @ (H2, TB) -> lane-dense (1, TB), no transposed operand.
    out = jnp.dot(w3_ref[...], h2, preferred_element_type=jnp.float32)
    o_ref[...] = (out + b3_ref[...]).astype(o_ref.dtype)


def value_net_forward(x, params, *, tile_b=None, vmem_limit_bytes=None):
    """x: (B, state_dim) f32. params: dict from init_params. Returns (B, 1) f32."""
    cfg = _GEN_CONFIG[_tpu_generation()]
    if tile_b is None:
        tile_b = cfg["tile_b"]
    if vmem_limit_bytes is None:
        vmem_limit_bytes = cfg["vmem"]
    assert tile_b % 128 == 0, "tile_b must be a multiple of 128 (lane width)"

    B, S = x.shape
    assert S + 1 <= AUG, "state_dim too large for the augmented layer-1 packing"

    # ---- Batch tile selection ----------------------------------------------
    if B <= tile_b:
        if cfg["split"] and B >= 256:
            # v7x: >= 2 grid steps so ("parallel",) shards over both TensorCores.
            TB = _round_up(-(-B // 2), 128)
        elif B >= 128:
            TB = _round_up(B, 128)       # keep the (1, TB) output store unmasked
        else:
            TB = _round_up(B, 8)         # tiny batch: single sublane-aligned tile
    else:
        TB = tile_b
    B_pad = _round_up(B, TB)
    num_tiles = B_pad // TB

    # ---- Pack x feature-major with the augmented ones/bias row (tiny op) ----
    x_fm = jnp.zeros((AUG, B_pad), jnp.float32)
    x_fm = x_fm.at[:S, :B].set(x.T)
    x_fm = x_fm.at[S, :B].set(1.0)
    x_aug = x_fm.astype(jnp.bfloat16)                          # (AUG, B_pad)

    flops = 2 * B_pad * (AUG * H1 + H1 * H2 + H2 * 1)
    bytes_accessed = int(
        x_aug.size * 2
        + (params["w1_aug"].size + params["w2"].size + params["w3"].size) * 2
        + (params["b2"].size + params["b3"].size) * 4
        + B_pad * 4)

    const = lambda i: (0, 0)         # params DMA'd once, stay VMEM-resident
    kernel = functools.partial(valuenet_kernel, n_in=S + 1, mxu_l1=cfg["mxu_l1"])

    out_row = pl.pallas_call(
        kernel,
        out_shape=jax.ShapeDtypeStruct((1, B_pad), jnp.float32),
        grid=(num_tiles,),
        in_specs=[
            pl.BlockSpec((AUG, TB), lambda i: (0, i)),   # x tiled over batch (lanes)
            pl.BlockSpec((H1, AUG), const),              # w1_aug (512, 16)
            pl.BlockSpec((H2, H1), const),               # w2     (256, 512)
            pl.BlockSpec((H2, 1), const),                # b2     (256, 1)
            pl.BlockSpec((1, H2), const),                # w3     (1, 256)
            pl.BlockSpec((1, 1), const),                 # b3     (1, 1)
        ],
        out_specs=pl.BlockSpec((1, TB), lambda i: (0, i)),   # lane-dense row
        compiler_params=pltpu.CompilerParams(
            dimension_semantics=("parallel",),
            vmem_limit_bytes=vmem_limit_bytes),
        cost_estimate=pl.CostEstimate(
            flops=flops, transcendentals=0, bytes_accessed=bytes_accessed),
    )(x_aug, params["w1_aug"], params["w2"], params["b2"],
      params["w3"], params["b3"])

    return out_row.reshape(B_pad, 1)[:B]


def init_params(key, state_dim):
    """torch.nn.Linear-style init (U(-1/sqrt(fan_in), +1/sqrt(fan_in))),
    packed in the kernel's feature-major layout (= torch's (out, in) layout):
      w1_aug: (512, AUG) bf16 = [fc1.weight | fc1.bias | zeros]
      w2:     (256, 512) bf16 = fc2.weight     b2: (256, 1) f32 = fc2.bias
      w3:     (1, 256)   bf16 = fc3.weight     b3: (1, 1)   f32 = fc3.bias
    """
    def uinit(k, shape, fan_in):
        bound = 1.0 / (fan_in ** 0.5)
        return jax.random.uniform(k, shape, minval=-bound, maxval=bound,
                                  dtype=jnp.float32)

    k = jax.random.split(key, 6)
    w1 = uinit(k[0], (H1, state_dim), state_dim)
    b1 = uinit(k[1], (H1,), state_dim)
    w2 = uinit(k[2], (H2, H1), H1)
    b2 = uinit(k[3], (H2,), H1)
    w3 = uinit(k[4], (1, H2), H2)
    b3 = uinit(k[5], (1,), H2)

    w1_aug = jnp.concatenate(
        [w1, b1[:, None], jnp.zeros((H1, AUG - state_dim - 1), jnp.float32)],
        axis=1)
    return {
        "w1_aug": w1_aug.astype(jnp.bfloat16),
        "w2": w2.astype(jnp.bfloat16),
        "b2": b2[:, None],
        "w3": w3.astype(jnp.bfloat16),
        "b3": b3[None, :],
    }


def reference_forward(x, params):
    """Pure-JAX reference with the same numerics as the kernel
    (bf16 weights/activations feeding f32-accumulated dots)."""
    B, S = x.shape
    x_aug = jnp.concatenate([x, jnp.ones((B, 1), x.dtype)], axis=1)
    x_aug = x_aug.astype(jnp.bfloat16)                             # (B, S+1)
    w1 = params["w1_aug"][:, :S + 1]                               # (512, S+1)
    h1 = jax.lax.dot_general(x_aug, w1, (((1,), (1,)), ((), ())),
                             preferred_element_type=jnp.float32)   # (B, 512)
    h1 = jnp.maximum(h1, 0.0).astype(jnp.bfloat16)
    h2 = jax.lax.dot_general(h1, params["w2"], (((1,), (1,)), ((), ())),
                             preferred_element_type=jnp.float32)   # (B, 256)
    h2 = jnp.maximum(h2 + params["b2"].T, 0.0).astype(jnp.bfloat16)
    out = jax.lax.dot_general(h2, params["w3"], (((1,), (1,)), ((), ())),
                              preferred_element_type=jnp.float32)  # (B, 1)
    return out + params["b3"]


if __name__ == "__main__":
    state_dim = 2

    key = jax.random.PRNGKey(0)
    k_params, k_x1, k_x2 = jax.random.split(key, 3)
    params = init_params(k_params, state_dim)

    # Small single-tile case (matches the original test shape).
    x = jax.random.normal(k_x1, (8, state_dim), dtype=jnp.float32)
    out = jax.block_until_ready(value_net_forward(x, params))
    ref = reference_forward(x, params)
    assert out.shape == (8, 1), out.shape
    assert jnp.allclose(out, ref, atol=5e-3, rtol=5e-3), "mismatch vs reference"

    # Multi-tile case exercising the batch grid + padding (B=300, TB=128 -> 3 tiles).
    x2 = jax.random.normal(k_x2, (300, state_dim), dtype=jnp.float32)
    out2 = jax.block_until_ready(value_net_forward(x2, params, tile_b=128))
    ref2 = reference_forward(x2, params)
    assert out2.shape == (300, 1), out2.shape
    assert jnp.allclose(out2, ref2, atol=5e-3, rtol=5e-3), "mismatch vs reference (tiled)"

    print("KERNEL_OK")
</pallas_src>

<mosaic_0001>
module attributes {stable_mosaic.version = 11 : i64} {
  func.func @valuenet_kernel(%arg0: i32, %arg1: memref<16x8xbf16, #tpu.memory_space<vmem>>, %arg2: memref<512x16xbf16, #tpu.memory_space<vmem>>, %arg3: memref<256x512xbf16, #tpu.memory_space<vmem>>, %arg4: memref<256x1xf32, #tpu.memory_space<vmem>>, %arg5: memref<1x256xbf16, #tpu.memory_space<vmem>>, %arg6: memref<1x1xf32, #tpu.memory_space<vmem>>, %arg7: memref<1x8xf32, #tpu.memory_space<vmem>>) attributes {dimension_semantics = [#tpu.dimension_semantics<parallel>], iteration_bounds = array<i64: 1>, scalar_prefetch = 0 : i64, scratch_operands = 0 : i64, tpu.core_type = #tpu.core_type<tc>, window_params = [{transform_indices = @transform_0, window_bounds = array<i64: 16, 8>}, {pipeline_mode = #tpu.pipeline_mode<synchronous>, transform_indices = @transform_1, window_bounds = array<i64: 512, 16>}, {pipeline_mode = #tpu.pipeline_mode<synchronous>, transform_indices = @transform_2, window_bounds = array<i64: 256, 512>}, {pipeline_mode = #tpu.pipeline_mode<synchronous>, transform_indices = @transform_3, window_bounds = array<i64: 256, 1>}, {pipeline_mode = #tpu.pipeline_mode<synchronous>, transform_indices = @transform_4, window_bounds = array<i64: 1, 256>}, {pipeline_mode = #tpu.pipeline_mode<synchronous>, transform_indices = @transform_5, window_bounds = array<i64: 1, 1>}, {transform_indices = @transform_6, window_bounds = array<i64: 1, 8>}]} {
    %c0 = arith.constant 0 : index
    %c0_0 = arith.constant 0 : index
    %0 = vector.load %arg1[%c0, %c0_0] : memref<16x8xbf16, #tpu.memory_space<vmem>>, vector<16x8xbf16>
    %c0_1 = arith.constant 0 : index
    %c0_2 = arith.constant 0 : index
    %1 = vector.load %arg2[%c0_1, %c0_2] : memref<512x16xbf16, #tpu.memory_space<vmem>>, vector<512x16xbf16>
    %cst = arith.constant dense<0.000000e+00> : vector<512x8xf32>
    %2 = tpu.matmul %1, %0, %cst {dimension_numbers = #tpu.dot_dimension_numbers<[1], [0], [0], [1], [0, 0, 1, 1], [], []>} : vector<512x16xbf16>, vector<16x8xbf16>, vector<512x8xf32> -> vector<512x8xf32>
    %cst_3 = arith.constant 0.000000e+00 : f32
    %3 = vector.broadcast %cst_3 : f32 to vector<512x8xf32>
    %4 = arith.maximumf %2, %3 : vector<512x8xf32>
    %5 = arith.truncf %4 : vector<512x8xf32> to vector<512x8xbf16>
    %c0_4 = arith.constant 0 : index
    %c0_5 = arith.constant 0 : index
    %6 = vector.load %arg3[%c0_4, %c0_5] : memref<256x512xbf16, #tpu.memory_space<vmem>>, vector<256x512xbf16>
    %cst_6 = arith.constant dense<0.000000e+00> : vector<256x8xf32>
    %7 = tpu.matmul %6, %5, %cst_6 {dimension_numbers = #tpu.dot_dimension_numbers<[1], [0], [0], [1], [0, 0, 1, 1], [], []>} : vector<256x512xbf16>, vector<512x8xbf16>, vector<256x8xf32> -> vector<256x8xf32>
    %c0_7 = arith.constant 0 : index
    %c0_8 = arith.constant 0 : index
    %8 = vector.load %arg4[%c0_7, %c0_8] : memref<256x1xf32, #tpu.memory_space<vmem>>, vector<256x1xf32>
    %9 = vector.broadcast %8 : vector<256x1xf32> to vector<256x8xf32>
    %10 = arith.addf %7, %9 : vector<256x8xf32>
    %cst_9 = arith.constant 0.000000e+00 : f32
    %11 = vector.broadcast %cst_9 : f32 to vector<256x8xf32>
    %12 = arith.maximumf %10, %11 : vector<256x8xf32>
    %13 = arith.truncf %12 : vector<256x8xf32> to vector<256x8xbf16>
    %c0_10 = arith.constant 0 : index
    %c0_11 = arith.constant 0 : index
    %14 = vector.load %arg5[%c0_10, %c0_11] : memref<1x256xbf16, #tpu.memory_space<vmem>>, vector<1x256xbf16>
    %cst_12 = arith.constant dense<0.000000e+00> : vector<1x8xf32>
    %15 = tpu.matmul %14, %13, %cst_12 {dimension_numbers = #tpu.dot_dimension_numbers<[1], [0], [0], [1], [0, 0, 1, 1], [], []>} : vector<1x256xbf16>, vector<256x8xbf16>, vector<1x8xf32> -> vector<1x8xf32>
    %c0_13 = arith.constant 0 : index
    %c0_14 = arith.constant 0 : index
    %16 = vector.load %arg6[%c0_13, %c0_14] : memref<1x1xf32, #tpu.memory_space<vmem>>, vector<1x1xf32>
    %17 = vector.broadcast %16 : vector<1x1xf32> to vector<1x8xf32>
    %18 = arith.addf %15, %17 : vector<1x8xf32>
    %c0_15 = arith.constant 0 : index
    %c0_16 = arith.constant 0 : index
    %19 = vector.load %arg7[%c0_15, %c0_16] : memref<1x8xf32, #tpu.memory_space<vmem>>, vector<1x8xf32>
    tpu.vector_store %arg7[%c0_15, %c0_16], %18 {strides = array<i32>} : memref<1x8xf32, #tpu.memory_space<vmem>>, vector<1x8xf32>,
    return
  }
  func.func @transform_0(%arg0: i32) -> (i32, i32) {
    %c0_i32 = arith.constant 0 : i32
    %c0_i32_0 = arith.constant 0 : i32
    return %c0_i32, %arg0 : i32, i32
  }
  func.func @transform_1(%arg0: i32) -> (i32, i32) {
    %c0_i32 = arith.constant 0 : i32
    %c0_i32_0 = arith.constant 0 : i32
    %c0_i32_1 = arith.constant 0 : i32
    return %c0_i32, %c0_i32_0 : i32, i32
  }
  func.func @transform_2(%arg0: i32) -> (i32, i32) {
    %c0_i32 = arith.constant 0 : i32
    %c0_i32_0 = arith.constant 0 : i32
    %c0_i32_1 = arith.constant 0 : i32
    return %c0_i32, %c0_i32_0 : i32, i32
  }
  func.func @transform_3(%arg0: i32) -> (i32, i32) {
    %c0_i32 = arith.constant 0 : i32
    %c0_i32_0 = arith.constant 0 : i32
    %c0_i32_1 = arith.constant 0 : i32
    return %c0_i32, %c0_i32_0 : i32, i32
  }
  func.func @transform_4(%arg0: i32) -> (i32, i32) {
    %c0_i32 = arith.constant 0 : i32
    %c0_i32_0 = arith.constant 0 : i32
    %c0_i32_1 = arith.constant 0 : i32
    return %c0_i32, %c0_i32_0 : i32, i32
  }
  func.func @transform_5(%arg0: i32) -> (i32, i32) {
    %c0_i32 = arith.constant 0 : i32
    %c0_i32_0 = arith.constant 0 : i32
    %c0_i32_1 = arith.constant 0 : i32
    return %c0_i32, %c0_i32_0 : i32, i32
  }
  func.func @transform_6(%arg0: i32) -> (i32, i32) {
    %c0_i32 = arith.constant 0 : i32
    %c0_i32_0 = arith.constant 0 : i32
    return %c0_i32, %arg0 : i32, i32
  }
}

</mosaic_0001>

<llo_original>
// kernel: tpu_custom_call.1
$region0: #{tpu_custom_call.1}
  #allocation0 [shape = 'u32[]', space=smem, size = 0x4, offset = 0x4, fixed_abs, tag = 'smem constant byte address 0x4 - core index']
  #allocation1 [shape = 'u32[144,128]{1,0:T(1,128)}', space=vmem, size = 0x12000, scoped, tag = 'internal scratch']
  #allocation2 [shape = 'f32[1,1]{1,0:T(1,128)S(1)}', space=vmem, size = 0x200, scoped, tag = 'scoped memory for tpu_custom_call.1']
  %s0 = inlined_call_operand.vmem [shape: bf16[16,8], index: 0, kind: input, shape index: {}]
  %s1 = inlined_call_operand.vmem [shape: bf16[512,16], index: 1, kind: input, shape index: {}]
  %s2 = inlined_call_operand.vmem [shape: bf16[256,512], index: 2, kind: input, shape index: {}]
  %s3 = inlined_call_operand.vmem [shape: f32[256,1], index: 3, kind: input, shape index: {}]
  %s4 = inlined_call_operand.vmem [shape: bf16[1,256], index: 4, kind: input, shape index: {}]
  %s5 = inlined_call_operand.<no memory space> [shape: f32[1,1], index: 5, kind: input, shape index: {}]
  %s6 = inlined_call_operand.hbm [shape: f32[1,8], index: 6, kind: output, shape index: {}]
  %s7 = sld [smem:[#allocation0]]
  $region34: #{tpu_custom_call.1} parent=0
    _
  %s9 = ssub.s32 1, %s7
  %s10 = scalar_select 0, %s9, %s7
  %v11 = vstv %s5
  %12 = vst [vmem:[#allocation2] sm:$0x1] %v11
  $region1: #{tpu_custom_call.1} parent=0
    #allocation3 [shape = 'u8[512]{0}', space=vmem, size = 0x400, scoped, tag = 'output window, operand 0, single buffered']
    #allocation4 [shape = 's32[1]{0}', space=sflag, size = 0x4, scoped, tag = 'scoped memory for tpu_custom_call.1']
    %13 = vsyncpa [#allocation4], 0
    // Predicated region
    $region2: #{tpu_custom_call.1} parent=1 // pred_check
      _
    $region3: #{tpu_custom_call.1} parent=1 // pred_check_branch
      %15 = sbr.rel (0) target = $region5
    $region4: #{tpu_custom_call.1} parent=1 // pred_region
      _
    $region5: #{tpu_custom_call.1} parent=1 // pred_fallthru
      _
    // Predicated region
    $region6: #{tpu_custom_call.1} parent=1 // pred_check
      _
    $region7: #{tpu_custom_call.1} parent=1 // pred_check_branch
      %17 = sbr.rel (0) target = $region9
    $region8: #{tpu_custom_call.1} parent=1 // pred_region
      _
    $region9: #{tpu_custom_call.1} parent=1 // pred_fallthru
      _
    // Predicated region
    $region10: #{tpu_custom_call.1} parent=1 // pred_check
      _
    $region11: #{tpu_custom_call.1} parent=1 // pred_check_branch
      %19 = sbr.rel (0) target = $region13
    $region12: #{tpu_custom_call.1} parent=1 // pred_region
      _
    $region13: #{tpu_custom_call.1} parent=1 // pred_fallthru
      _
    // Predicated region
    $region14: #{tpu_custom_call.1} parent=1 // pred_check
      _
    $region15: #{tpu_custom_call.1} parent=1 // pred_check_branch
      %21 = sbr.rel (0) target = $region17
    $region16: #{tpu_custom_call.1} parent=1 // pred_region
      _
    $region17: #{tpu_custom_call.1} parent=1 // pred_fallthru
      _
    // Predicated region
    $region18: #{tpu_custom_call.1} parent=1 // pred_check
      _
    $region19: #{tpu_custom_call.1} parent=1 // pred_check_branch
      %23 = sbr.rel (0) target = $region21
    $region20: #{tpu_custom_call.1} parent=1 // pred_region
      _
    $region21: #{tpu_custom_call.1} parent=1 // pred_fallthru
      _
    // Predicated region
    $region22: #{tpu_custom_call.1} parent=1 // pred_check
      _
    $region23: #{tpu_custom_call.1} parent=1 // pred_check_branch
      %25 = sbr.rel (0) target = $region25
    $region24: #{tpu_custom_call.1} parent=1 // pred_region
      _
    $region25: #{tpu_custom_call.1} parent=1 // pred_fallthru
      _
    %v27 = vld [vmem:[%s0] sm:$0xf]
    %v28 = vld [vmem:[%s0 + $0x4] sm:$0xf]
    %v29 = vld [vmem:[%s1] sm:$0xf]
    %v30 = vld [vmem:[%s1 + $0x4] sm:$0xf]
    %v31 = vld [vmem:[%s1 + $0x8] sm:$0xf]
    %v32 = vld [vmem:[%s1 + $0xc] sm:$0xf]
    %v33 = vld [vmem:[%s1 + $0x10] sm:$0xf]
    %v34 = vld [vmem:[%s1 + $0x14] sm:$0xf]
    %v35 = vld [vmem:[%s1 + $0x18] sm:$0xf]
    %v36 = vld [vmem:[%s1 + $0x1c] sm:$0xf]
    %v37 = vld [vmem:[%s1 + $0x20] sm:$0xf]
    %v38 = vld [vmem:[%s1 + $0x24] sm:$0xf]
    %v39 = vld [vmem:[%s1 + $0x28] sm:$0xf]
    %v40 = vld [vmem:[%s1 + $0x2c] sm:$0xf]
    %v41 = vld [vmem:[%s1 + $0x30] sm:$0xf]
    %v42 = vld [vmem:[%s1 + $0x34] sm:$0xf]
    %v43 = vld [vmem:[%s1 + $0x38] sm:$0xf]
    %v44 = vld [vmem:[%s1 + $0x3c] sm:$0xf]
    %v45 = vld [vmem:[%s1 + $0x40] sm:$0xf]
    %v46 = vld [vmem:[%s1 + $0x44] sm:$0xf]
    %v47 = vld [vmem:[%s1 + $0x48] sm:$0xf]
    %v48 = vld [vmem:[%s1 + $0x4c] sm:$0xf]
    %v49 = vld [vmem:[%s1 + $0x50] sm:$0xf]
    %v50 = vld [vmem:[%s1 + $0x54] sm:$0xf]
    %v51 = vld [vmem:[%s1 + $0x58] sm:$0xf]
    %v52 = vld [vmem:[%s1 + $0x5c] sm:$0xf]
    %v53 = vld [vmem:[%s1 + $0x60] sm:$0xf]
    %v54 = vld [vmem:[%s1 + $0x64] sm:$0xf]
    %v55 = vld [vmem:[%s1 + $0x68] sm:$0xf]
    %v56 = vld [vmem:[%s1 + $0x6c] sm:$0xf]
    %v57 = vld [vmem:[%s1 + $0x70] sm:$0xf]
    %v58 = vld [vmem:[%s1 + $0x74] sm:$0xf]
    %v59 = vld [vmem:[%s1 + $0x78] sm:$0xf]
    %v60 = vld [vmem:[%s1 + $0x7c] sm:$0xf]
    %v61 = vld [vmem:[%s1 + $0x80] sm:$0xf]
    %v62 = vld [vmem:[%s1 + $0x84] sm:$0xf]
    %v63 = vld [vmem:[%s1 + $0x88] sm:$0xf]
    %v64 = vld [vmem:[%s1 + $0x8c] sm:$0xf]
    %v65 = vld [vmem:[%s1 + $0x90] sm:$0xf]
    %v66 = vld [vmem:[%s1 + $0x94] sm:$0xf]
    %v67 = vld [vmem:[%s1 + $0x98] sm:$0xf]
    %v68 = vld [vmem:[%s1 + $0x9c] sm:$0xf]
    %v69 = vld [vmem:[%s1 + $0xa0] sm:$0xf]
    %v70 = vld [vmem:[%s1 + $0xa4] sm:$0xf]
    %v71 = vld [vmem:[%s1 + $0xa8] sm:$0xf]
    %v72 = vld [vmem:[%s1 + $0xac] sm:$0xf]
    %v73 = vld [vmem:[%s1 + $0xb0] sm:$0xf]
    %v74 = vld [vmem:[%s1 + $0xb4] sm:$0xf]
    %v75 = vld [vmem:[%s1 + $0xb8] sm:$0xf]
    %v76 = vld [vmem:[%s1 + $0xbc] sm:$0xf]
    %v77 = vld [vmem:[%s1 + $0xc0] sm:$0xf]
    %v78 = vld [vmem:[%s1 + $0xc4] sm:$0xf]
    %v79 = vld [vmem:[%s1 + $0xc8] sm:$0xf]
    %v80 = vld [vmem:[%s1 + $0xcc] sm:$0xf]
    %v81 = vld [vmem:[%s1 + $0xd0] sm:$0xf]
    %v82 = vld [vmem:[%s1 + $0xd4] sm:$0xf]
    %v83 = vld [vmem:[%s1 + $0xd8] sm:$0xf]
    %v84 = vld [vmem:[%s1 + $0xdc] sm:$0xf]
    %v85 = vld [vmem:[%s1 + $0xe0] sm:$0xf]
    %v86 = vld [vmem:[%s1 + $0xe4] sm:$0xf]
    %v87 = vld [vmem:[%s1 + $0xe8] sm:$0xf]
    %v88 = vld [vmem:[%s1 + $0xec] sm:$0xf]
    %v89 = vld [vmem:[%s1 + $0xf0] sm:$0xf]
    %v90 = vld [vmem:[%s1 + $0xf4] sm:$0xf]
    %v91 = vld [vmem:[%s1 + $0xf8] sm:$0xf]
    %v92 = vld [vmem:[%s1 + $0xfc] sm:$0xf]
    %v157 = vunpack.c.l.b16 %v29
    %v158 = vunpack.c.l.b16 %v30
    %v159 = vunpack.c.l.b16 %v31
    %v160 = vunpack.c.l.b16 %v32
    %v161 = vunpack.c.l.b16 %v33
    %v162 = vunpack.c.l.b16 %v34
    %v163 = vunpack.c.l.b16 %v35
    %v164 = vunpack.c.l.b16 %v36
    %v165 = vunpack.c.l.b16 %v37
    %v166 = vunpack.c.l.b16 %v38
    %v167 = vunpack.c.l.b16 %v39
    %v168 = vunpack.c.l.b16 %v40
    %v169 = vunpack.c.l.b16 %v41
    %v170 = vunpack.c.l.b16 %v42
    %v171 = vunpack.c.l.b16 %v43
    %v172 = vunpack.c.l.b16 %v44
    %v173 = vunpack.c.l.b16 %v45
    %v174 = vunpack.c.l.b16 %v46
    %v175 = vunpack.c.l.b16 %v47
    %v176 = vunpack.c.l.b16 %v48
    %v177 = vunpack.c.l.b16 %v49
    %v178 = vunpack.c.l.b16 %v50
    %v179 = vunpack.c.l.b16 %v51
    %v180 = vunpack.c.l.b16 %v52
    %v181 = vunpack.c.l.b16 %v53
    %v182 = vunpack.c.l.b16 %v54
    %v183 = vunpack.c.l.b16 %v55
    %v184 = vunpack.c.l.b16 %v56
    %v185 = vunpack.c.l.b16 %v57
    %v186 = vunpack.c.l.b16 %v58
    %v187 = vunpack.c.l.b16 %v59
    %v188 = vunpack.c.l.b16 %v60
    %v189 = vunpack.c.l.b16 %v61
    %v190 = vunpack.c.l.b16 %v62
    %v191 = vunpack.c.l.b16 %v63
    %v192 = vunpack.c.l.b16 %v64
    %v193 = vunpack.c.l.b16 %v65
    %v194 = vunpack.c.l.b16 %v66
    %v195 = vunpack.c.l.b16 %v67
    %v196 = vunpack.c.l.b16 %v68
    %v197 = vunpack.c.l.b16 %v69
    %v198 = vunpack.c.l.b16 %v70
    %v199 = vunpack.c.l.b16 %v71
    %v200 = vunpack.c.l.b16 %v72
    %v201 = vunpack.c.l.b16 %v73
    %v202 = vunpack.c.l.b16 %v74
    %v203 = vunpack.c.l.b16 %v75
    %v204 = vunpack.c.l.b16 %v76
    %v205 = vunpack.c.l.b16 %v77
    %v206 = vunpack.c.l.b16 %v78
    %v207 = vunpack.c.l.b16 %v79
    %v208 = vunpack.c.l.b16 %v80
    %v209 = vunpack.c.l.b16 %v81
    %v210 = vunpack.c.l.b16 %v82
    %v211 = vunpack.c.l.b16 %v83
    %v212 = vunpack.c.l.b16 %v84
    %v213 = vunpack.c.l.b16 %v85
    %v214 = vunpack.c.l.b16 %v86
    %v215 = vunpack.c.l.b16 %v87
    %v216 = vunpack.c.l.b16 %v88
    %v217 = vunpack.c.l.b16 %v89
    %v218 = vunpack.c.l.b16 %v90
    %v219 = vunpack.c.l.b16 %v91
    %v220 = vunpack.c.l.b16 %v92
    %v221 = vpack.c.b16 %v158, %v157
    %v222 = vpack.c.b16 %v160, %v159
    %v223 = vpack.c.b16 %v162, %v161
    %v224 = vpack.c.b16 %v164, %v163
    %v225 = vpack.c.b16 %v166, %v165
    %v226 = vpack.c.b16 %v168, %v167
    %v227 = vpack.c.b16 %v170, %v169
    %v228 = vpack.c.b16 %v172, %v171
    %v229 = vpack.c.b16 %v174, %v173
    %v230 = vpack.c.b16 %v176, %v175
    %v231 = vpack.c.b16 %v178, %v177
    %v232 = vpack.c.b16 %v180, %v179
    %v233 = vpack.c.b16 %v182, %v181
    %v234 = vpack.c.b16 %v184, %v183
    %v235 = vpack.c.b16 %v186, %v185
    %v236 = vpack.c.b16 %v188, %v187
    %v237 = vpack.c.b16 %v190, %v189
    %v238 = vpack.c.b16 %v192, %v191
    %v239 = vpack.c.b16 %v194, %v193
    %v240 = vpack.c.b16 %v196, %v195
    %v241 = vpack.c.b16 %v198, %v197
    %v242 = vpack.c.b16 %v200, %v199
    %v243 = vpack.c.b16 %v202, %v201
    %v244 = vpack.c.b16 %v204, %v203
    %v245 = vpack.c.b16 %v206, %v205
    %v246 = vpack.c.b16 %v208, %v207
    %v247 = vpack.c.b16 %v210, %v209
    %v248 = vpack.c.b16 %v212, %v211
    %v249 = vpack.c.b16 %v214, %v213
    %v250 = vpack.c.b16 %v216, %v215
    %v251 = vpack.c.b16 %v218, %v217
    %v252 = vpack.c.b16 %v220, %v219
    %v255 = vunpack.c.l.b16 %v27
    %v256 = vunpack.c.l.b16 %v28
    %v257 = vpack.c.b16 %v256, %v255
    %vm259 = vcmask 130048
    %v261 = vsel %vm259, %v221, 0
    %v264 = vsel %vm259, %v222, 0
    %v267 = vsel %vm259, %v223, 0
    %v270 = vsel %vm259, %v224, 0
    %v273 = vsel %vm259, %v225, 0
    %v276 = vsel %vm259, %v226, 0
    %v279 = vsel %vm259, %v227, 0
    %v282 = vsel %vm259, %v228, 0
    %v285 = vsel %vm259, %v229, 0
    %v288 = vsel %vm259, %v230, 0
    %v291 = vsel %vm259, %v231, 0
    %v294 = vsel %vm259, %v232, 0
    %v297 = vsel %vm259, %v233, 0
    %v300 = vsel %vm259, %v234, 0
    %v303 = vsel %vm259, %v235, 0
    %v306 = vsel %vm259, %v236, 0
    %v309 = vsel %vm259, %v237, 0
    %v312 = vsel %vm259, %v238, 0
    %v315 = vsel %vm259, %v239, 0
    %v318 = vsel %vm259, %v240, 0
    %v321 = vsel %vm259, %v241, 0
    %v324 = vsel %vm259, %v242, 0
    %v327 = vsel %vm259, %v243, 0
    %v330 = vsel %vm259, %v244, 0
    %v333 = vsel %vm259, %v245, 0
    %v336 = vsel %vm259, %v246, 0
    %v339 = vsel %vm259, %v247, 0
    %v342 = vsel %vm259, %v248, 0
    %v345 = vsel %vm259, %v249, 0
    %v348 = vsel %vm259, %v250, 0
    %v351 = vsel %vm259, %v251, 0
    %v354 = vsel %vm259, %v252, 0
    %356 = vmatprep.subr.bf16.mxu0 0
    %357 = vmatpush1.bf16.msra.mxu0 %v257
    %358 = vmatprep.subr.bf16.mxu0 0
    %359 = vmatpush1.bf16.msra.mxu0 0
    %360 = vmatprep.subr.bf16.mxu0 0
    %361 = vmatpush1.bf16.msra.mxu0 0
    %362 = vmatprep.subr.bf16.mxu0 0
    %363 = vmatpush1.bf16.msra.mxu0 0
    %364 = vmatprep.subr.bf16.mxu0 0
    %365 = vmatpush1.bf16.msra.mxu0 0
    %366 = vmatprep.subr.bf16.mxu0 0
    %367 = vmatpush1.bf16.msra.mxu0 0
    %368 = vmatprep.subr.bf16.mxu0 0
    %369 = vmatpush1.bf16.msra.mxu0 0
    %370 = vmatprep.subr.bf16.mxu0 0
    %371 = vmatpush1.bf16.msra.mxu0 0
    %372 = vmatprep.subr.bf16.mxu0 0
    %373 = vmatpush1.bf16.msra.mxu0 0
    %374 = vmatprep.subr.bf16.mxu0 0
    %375 = vmatpush1.bf16.msra.mxu0 0
    %376 = vmatprep.subr.bf16.mxu0 0
    %377 = vmatpush1.bf16.msra.mxu0 0
    %378 = vmatprep.subr.bf16.mxu0 0
    %379 = vmatpush1.bf16.msra.mxu0 0
    %380 = vmatprep.subr.bf16.mxu0 0
    %381 = vmatpush1.bf16.msra.mxu0 0
    %382 = vmatprep.subr.bf16.mxu0 0
    %383 = vmatpush1.bf16.msra.mxu0 0
    %384 = vmatprep.subr.bf16.mxu0 0
    %385 = vmatpush1.bf16.msra.mxu0 0
    %386 = vmatprep.subr.bf16.mxu0 0
    %387 = vmatpush1.bf16.msra.mxu0 0
    %388 = vmatprep.mubr.bf16.mxu0 0
    %389 = vmatmul.mubr.bf16.gmra.mrb[0].mxu0 %v261
    %v390 = vpop.f32.mrb[0].mxu0
    %v391 = vadd.f32 0.0, %v390
    %v392 = vpop.f32.mrb[0].mxu0
    %v393 = vpop.f32.mrb[0].mxu0
    %v394 = vadd.f32 0.0, %v393
    %v395 = vpop.f32.mrb[0].mxu0
    %396 = vmatprep.mubr.bf16.mxu0 0
    %397 = vmatmul.mubr.bf16.gmra.mrb[0].mxu0 %v264
    %v398 = vpop.f32.mrb[0].mxu0
    %v399 = vadd.f32 0.0, %v398
    %v400 = vpop.f32.mrb[0].mxu0
    %v401 = vpop.f32.mrb[0].mxu0
    %v402 = vadd.f32 0.0, %v401
    %v403 = vpop.f32.mrb[0].mxu0
    %404 = vmatprep.mubr.bf16.mxu0 0
    %405 = vmatmul.mubr.bf16.gmra.mrb[0].mxu0 %v267
    %v406 = vpop.f32.mrb[0].mxu0
    %v407 = vadd.f32 0.0, %v406
    %v408 = vpop.f32.mrb[0].mxu0
    %v409 = vpop.f32.mrb[0].mxu0
    %v410 = vadd.f32 0.0, %v409
    %v411 = vpop.f32.mrb[0].mxu0
    %412 = vmatprep.mubr.bf16.mxu0 0
    %413 = vmatmul.mubr.bf16.gmra.mrb[0].mxu0 %v270
    %v414 = vpop.f32.mrb[0].mxu0
    %v415 = vadd.f32 0.0, %v414
    %v416 = vpop.f32.mrb[0].mxu0
    %v417 = vpop.f32.mrb[0].mxu0
    %v418 = vadd.f32 0.0, %v417
    %v419 = vpop.f32.mrb[0].mxu0
    %420 = vmatprep.mubr.bf16.mxu0 0
    %421 = vmatmul.mubr.bf16.gmra.mrb[0].mxu0 %v273
    %v422 = vpop.f32.mrb[0].mxu0
    %v423 = vadd.f32 0.0, %v422
    %v424 = vpop.f32.mrb[0].mxu0
    %v425 = vpop.f32.mrb[0].mxu0
    %v426 = vadd.f32 0.0, %v425
    %v427 = vpop.f32.mrb[0].mxu0
    %428 = vmatprep.mubr.bf16.mxu0 0
    %429 = vmatmul.mubr.bf16.gmra.mrb[0].mxu0 %v276
    %v430 = vpop.f32.mrb[0].mxu0
    %v431 = vadd.f32 0.0, %v430
    %v432 = vpop.f32.mrb[0].mxu0
    %v433 = vpop.f32.mrb[0].mxu0
    %v434 = vadd.f32 0.0, %v433
    %v435 = vpop.f32.mrb[0].mxu0
    %436 = vmatprep.mubr.bf16.mxu0 0
    %437 = vmatmul.mubr.bf16.gmra.mrb[0].mxu0 %v279
    %v438 = vpop.f32.mrb[0].mxu0
    %v439 = vadd.f32 0.0, %v438
    %v440 = vpop.f32.mrb[0].mxu0
    %v441 = vpop.f32.mrb[0].mxu0
    %v442 = vadd.f32 0.0, %v441
    %v443 = vpop.f32.mrb[0].mxu0
    %444 = vmatprep.mubr.bf16.mxu0 0
    %445 = vmatmul.mubr.bf16.gmra.mrb[0].mxu0 %v282
    %v446 = vpop.f32.mrb[0].mxu0
    %v447 = vadd.f32 0.0, %v446
    %v448 = vpop.f32.mrb[0].mxu0
    %v449 = vpop.f32.mrb[0].mxu0
    %v450 = vadd.f32 0.0, %v449
    %v451 = vpop.f32.mrb[0].mxu0
    %452 = vmatprep.mubr.bf16.mxu0 0
    %453 = vmatmul.mubr.bf16.gmra.mrb[0].mxu0 %v285
    %v454 = vpop.f32.mrb[0].mxu0
    %v455 = vadd.f32 0.0, %v454
    %v456 = vpop.f32.mrb[0].mxu0
    %v457 = vpop.f32.mrb[0].mxu0
    %v458 = vadd.f32 0.0, %v457
    %v459 = vpop.f32.mrb[0].mxu0
    %460 = vmatprep.mubr.bf16.mxu0 0
    %461 = vmatmul.mubr.bf16.gmra.mrb[0].mxu0 %v288
    %v462 = vpop.f32.mrb[0].mxu0
    %v463 = vadd.f32 0.0, %v462
    %v464 = vpop.f32.mrb[0].mxu0
    %v465 = vpop.f32.mrb[0].mxu0
    %v466 = vadd.f32 0.0, %v465
    %v467 = vpop.f32.mrb[0].mxu0
    %468 = vmatprep.mubr.bf16.mxu0 0
    %469 = vmatmul.mubr.bf16.gmra.mrb[0].mxu0 %v291
    %v470 = vpop.f32.mrb[0].mxu0
    %v471 = vadd.f32 0.0, %v470
    %v472 = vpop.f32.mrb[0].mxu0
    %v473 = vpop.f32.mrb[0].mxu0
    %v474 = vadd.f32 0.0, %v473
    %v475 = vpop.f32.mrb[0].mxu0
    %476 = vmatprep.mubr.bf16.mxu0 0
    %477 = vmatmul.mubr.bf16.gmra.mrb[0].mxu0 %v294
    %v478 = vpop.f32.mrb[0].mxu0
    %v479 = vadd.f32 0.0, %v478
    %v480 = vpop.f32.mrb[0].mxu0
    %v481 = vpop.f32.mrb[0].mxu0
    %v482 = vadd.f32 0.0, %v481
    %v483 = vpop.f32.mrb[0].mxu0
    %484 = vmatprep.mubr.bf16.mxu0 0
    %485 = vmatmul.mubr.bf16.gmra.mrb[0].mxu0 %v297
    %v486 = vpop.f32.mrb[0].mxu0
    %v487 = vadd.f32 0.0, %v486
    %v488 = vpop.f32.mrb[0].mxu0
    %v489 = vpop.f32.mrb[0].mxu0
    %v490 = vadd.f32 0.0, %v489
    %v491 = vpop.f32.mrb[0].mxu0
    %492 = vmatprep.mubr.bf16.mxu0 0
    %493 = vmatmul.mubr.bf16.gmra.mrb[0].mxu0 %v300
    %v494 = vpop.f32.mrb[0].mxu0
    %v495 = vadd.f32 0.0, %v494
    %v496 = vpop.f32.mrb[0].mxu0
    %v497 = vpop.f32.mrb[0].mxu0
    %v498 = vadd.f32 0.0, %v497
    %v499 = vpop.f32.mrb[0].mxu0
    %500 = vmatprep.mubr.bf16.mxu0 0
    %501 = vmatmul.mubr.bf16.gmra.mrb[0].mxu0 %v303
    %v502 = vpop.f32.mrb[0].mxu0
    %v503 = vadd.f32 0.0, %v502
    %v504 = vpop.f32.mrb[0].mxu0
    %v505 = vpop.f32.mrb[0].mxu0
    %v506 = vadd.f32 0.0, %v505
    %v507 = vpop.f32.mrb[0].mxu0
    %508 = vmatprep.mubr.bf16.mxu0 0
    %509 = vmatmul.mubr.bf16.gmra.mrb[0].mxu0 %v306
    %v510 = vpop.f32.mrb[0].mxu0
    %v511 = vadd.f32 0.0, %v510
    %v512 = vpop.f32.mrb[0].mxu0
    %v513 = vpop.f32.mrb[0].mxu0
    %v514 = vadd.f32 0.0, %v513
    %v515 = vpop.f32.mrb[0].mxu0
    %516 = vmatprep.mubr.bf16.mxu0 0
    %517 = vmatmul.mubr.bf16.gmra.mrb[0].mxu0 %v309
    %v518 = vpop.f32.mrb[0].mxu0
    %v519 = vadd.f32 0.0, %v518
    %v520 = vpop.f32.mrb[0].mxu0
    %v521 = vpop.f32.mrb[0].mxu0
    %v522 = vadd.f32 0.0, %v521
    %v523 = vpop.f32.mrb[0].mxu0
    %524 = vmatprep.mubr.bf16.mxu0 0
    %525 = vmatmul.mubr.bf16.gmra.mrb[0].mxu0 %v312
    %v526 = vpop.f32.mrb[0].mxu0
    %v527 = vadd.f32 0.0, %v526
    %v528 = vpop.f32.mrb[0].mxu0
    %v529 = vpop.f32.mrb[0].mxu0
    %v530 = vadd.f32 0.0, %v529
    %v531 = vpop.f32.mrb[0].mxu0
    %532 = vmatprep.mubr.bf16.mxu0 0
    %533 = vmatmul.mubr.bf16.gmra.mrb[0].mxu0 %v315
    %v534 = vpop.f32.mrb[0].mxu0
    %v535 = vadd.f32 0.0, %v534
    %v536 = vpop.f32.mrb[0].mxu0
    %v537 = vpop.f32.mrb[0].mxu0
    %v538 = vadd.f32 0.0, %v537
    %v539 = vpop.f32.mrb[0].mxu0
    %540 = vmatprep.mubr.bf16.mxu0 0
    %541 = vmatmul.mubr.bf16.gmra.mrb[0].mxu0 %v318
    %v542 = vpop.f32.mrb[0].mxu0
    %v543 = vadd.f32 0.0, %v542
    %v544 = vpop.f32.mrb[0].mxu0
    %v545 = vpop.f32.mrb[0].mxu0
    %v546 = vadd.f32 0.0, %v545
    %v547 = vpop.f32.mrb[0].mxu0
    %548 = vmatprep.mubr.bf16.mxu0 0
    %549 = vmatmul.mubr.bf16.gmra.mrb[0].mxu0 %v321
    %v550 = vpop.f32.mrb[0].mxu0
    %v551 = vadd.f32 0.0, %v550
    %v552 = vpop.f32.mrb[0].mxu0
    %v553 = vpop.f32.mrb[0].mxu0
    %v554 = vadd.f32 0.0, %v553
    %v555 = vpop.f32.mrb[0].mxu0
    %556 = vmatprep.mubr.bf16.mxu0 0
    %557 = vmatmul.mubr.bf16.gmra.mrb[0].mxu0 %v324
    %v558 = vpop.f32.mrb[0].mxu0
    %v559 = vadd.f32 0.0, %v558
    %v560 = vpop.f32.mrb[0].mxu0
    %v561 = vpop.f32.mrb[0].mxu0
    %v562 = vadd.f32 0.0, %v561
    %v563 = vpop.f32.mrb[0].mxu0
    %564 = vmatprep.mubr.bf16.mxu0 0
    %565 = vmatmul.mubr.bf16.gmra.mrb[0].mxu0 %v327
    %v566 = vpop.f32.mrb[0].mxu0
    %v567 = vadd.f32 0.0, %v566
    %v568 = vpop.f32.mrb[0].mxu0
    %v569 = vpop.f32.mrb[0].mxu0
    %v570 = vadd.f32 0.0, %v569
    %v571 = vpop.f32.mrb[0].mxu0
    %572 = vmatprep.mubr.bf16.mxu0 0
    %573 = vmatmul.mubr.bf16.gmra.mrb[0].mxu0 %v330
    %v574 = vpop.f32.mrb[0].mxu0
    %v575 = vadd.f32 0.0, %v574
    %v576 = vpop.f32.mrb[0].mxu0
    %v577 = vpop.f32.mrb[0].mxu0
    %v578 = vadd.f32 0.0, %v577
    %v579 = vpop.f32.mrb[0].mxu0
    %580 = vmatprep.mubr.bf16.mxu0 0
    %581 = vmatmul.mubr.bf16.gmra.mrb[0].mxu0 %v333
    %v582 = vpop.f32.mrb[0].mxu0
    %v583 = vadd.f32 0.0, %v582
    %v584 = vpop.f32.mrb[0].mxu0
    %v585 = vpop.f32.mrb[0].mxu0
    %v586 = vadd.f32 0.0, %v585
    %v587 = vpop.f32.mrb[0].mxu0
    %588 = vmatprep.mubr.bf16.mxu0 0
    %589 = vmatmul.mubr.bf16.gmra.mrb[0].mxu0 %v336
    %v590 = vpop.f32.mrb[0].mxu0
    %v591 = vadd.f32 0.0, %v590
    %v592 = vpop.f32.mrb[0].mxu0
    %v593 = vpop.f32.mrb[0].mxu0
    %v594 = vadd.f32 0.0, %v593
    %v595 = vpop.f32.mrb[0].mxu0
    %596 = vmatprep.mubr.bf16.mxu0 0
    %597 = vmatmul.mubr.bf16.gmra.mrb[0].mxu0 %v339
    %v598 = vpop.f32.mrb[0].mxu0
    %v599 = vadd.f32 0.0, %v598
    %v600 = vpop.f32.mrb[0].mxu0
    %v601 = vpop.f32.mrb[0].mxu0
    %v602 = vadd.f32 0.0, %v601
    %v603 = vpop.f32.mrb[0].mxu0
    %604 = vmatprep.mubr.bf16.mxu0 0
    %605 = vmatmul.mubr.bf16.gmra.mrb[0].mxu0 %v342
    %v606 = vpop.f32.mrb[0].mxu0
    %v607 = vadd.f32 0.0, %v606
    %v608 = vpop.f32.mrb[0].mxu0
    %v609 = vpop.f32.mrb[0].mxu0
    %v610 = vadd.f32 0.0, %v609
    %v611 = vpop.f32.mrb[0].mxu0
    %612 = vmatprep.mubr.bf16.mxu0 0
    %613 = vmatmul.mubr.bf16.gmra.mrb[0].mxu0 %v345
    %v614 = vpop.f32.mrb[0].mxu0
    %v615 = vadd.f32 0.0, %v614
    %v616 = vpop.f32.mrb[0].mxu0
    %v617 = vpop.f32.mrb[0].mxu0
    %v618 = vadd.f32 0.0, %v617
    %v619 = vpop.f32.mrb[0].mxu0
    %620 = vmatprep.mubr.bf16.mxu0 0
    %621 = vmatmul.mubr.bf16.gmra.mrb[0].mxu0 %v348
    %v622 = vpop.f32.mrb[0].mxu0
    %v623 = vadd.f32 0.0, %v622
    %v624 = vpop.f32.mrb[0].mxu0
    %v625 = vpop.f32.mrb[0].mxu0
    %v626 = vadd.f32 0.0, %v625
    %v627 = vpop.f32.mrb[0].mxu0
    %628 = vmatprep.mubr.bf16.mxu0 0
    %629 = vmatmul.mubr.bf16.gmra.mrb[0].mxu0 %v351
    %v630 = vpop.f32.mrb[0].mxu0
    %v631 = vadd.f32 0.0, %v630
    %v632 = vpop.f32.mrb[0].mxu0
    %v633 = vpop.f32.mrb[0].mxu0
    %v634 = vadd.f32 0.0, %v633
    %v635 = vpop.f32.mrb[0].mxu0
    %636 = vmatprep.mubr.bf16.mxu0 0
    %637 = vmatmul.mubr.bf16.gmra.mrb[0].mxu0 %v354
    %v638 = vpop.f32.mrb[0].mxu0
    %v639 = vadd.f32 0.0, %v638
    %v640 = vpop.f32.mrb[0].mxu0
    %v641 = vpop.f32.mrb[0].mxu0
    %v642 = vadd.f32 0.0, %v641
    %v643 = vpop.f32.mrb[0].mxu0
    %644 = vdwg.mxu0
    %v645 = vmax.f32 %v391, 0.0
    %v646 = vmax.f32 %v394, 0.0
    %v647 = vmax.f32 %v399, 0.0
    %v648 = vmax.f32 %v402, 0.0
    %v649 = vmax.f32 %v407, 0.0
    %v650 = vmax.f32 %v410, 0.0
    %v651 = vmax.f32 %v415, 0.0
    %v652 = vmax.f32 %v418, 0.0
    %v653 = vmax.f32 %v423, 0.0
    %v654 = vmax.f32 %v426, 0.0
    %v655 = vmax.f32 %v431, 0.0
    %v656 = vmax.f32 %v434, 0.0
    %v657 = vmax.f32 %v439, 0.0
    %v658 = vmax.f32 %v442, 0.0
    %v659 = vmax.f32 %v447, 0.0
    %v660 = vmax.f32 %v450, 0.0
    %v661 = vmax.f32 %v455, 0.0
    %v662 = vmax.f32 %v458, 0.0
    %v663 = vmax.f32 %v463, 0.0
    %v664 = vmax.f32 %v466, 0.0
    %v665 = vmax.f32 %v471, 0.0
    %v666 = vmax.f32 %v474, 0.0
    %v667 = vmax.f32 %v479, 0.0
    %v668 = vmax.f32 %v482, 0.0
    %v669 = vmax.f32 %v487, 0.0
    %v670 = vmax.f32 %v490, 0.0
    %v671 = vmax.f32 %v495, 0.0
    %v672 = vmax.f32 %v498, 0.0
    %v673 = vmax.f32 %v503, 0.0
    %v674 = vmax.f32 %v506, 0.0
    %v675 = vmax.f32 %v511, 0.0
    %v676 = vmax.f32 %v514, 0.0
    %v677 = vmax.f32 %v519, 0.0
    %v678 = vmax.f32 %v522, 0.0
    %v679 = vmax.f32 %v527, 0.0
    %v680 = vmax.f32 %v530, 0.0
    %v681 = vmax.f32 %v535, 0.0
    %v682 = vmax.f32 %v538, 0.0
    %v683 = vmax.f32 %v543, 0.0
    %v684 = vmax.f32 %v546, 0.0
    %v685 = vmax.f32 %v551, 0.0
    %v686 = vmax.f32 %v554, 0.0
    %v687 = vmax.f32 %v559, 0.0
    %v688 = vmax.f32 %v562, 0.0
    %v689 = vmax.f32 %v567, 0.0
    %v690 = vmax.f32 %v570, 0.0
    %v691 = vmax.f32 %v575, 0.0
    %v692 = vmax.f32 %v578, 0.0
    %v693 = vmax.f32 %v583, 0.0
    %v694 = vmax.f32 %v586, 0.0
    %v695 = vmax.f32 %v591, 0.0
    %v696 = vmax.f32 %v594, 0.0
    %v697 = vmax.f32 %v599, 0.0
    %v698 = vmax.f32 %v602, 0.0
    %v699 = vmax.f32 %v607, 0.0
    %v700 = vmax.f32 %v610, 0.0
    %v701 = vmax.f32 %v615, 0.0
    %v702 = vmax.f32 %v618, 0.0
    %v703 = vmax.f32 %v623, 0.0
    %v704 = vmax.f32 %v626, 0.0
    %v705 = vmax.f32 %v631, 0.0
    %v706 = vmax.f32 %v634, 0.0
    %v707 = vmax.f32 %v639, 0.0
    %v708 = vmax.f32 %v642, 0.0
    %v709 = vpack.c.bf16 %v646, %v645
    %v710 = vpack.c.bf16 %v648, %v647
    %v711 = vpack.c.bf16 %v650, %v649
    %v712 = vpack.c.bf16 %v652, %v651
    %v713 = vpack.c.bf16 %v654, %v653
    %v714 = vpack.c.bf16 %v656, %v655
    %v715 = vpack.c.bf16 %v658, %v657
    %v716 = vpack.c.bf16 %v660, %v659
    %v717 = vpack.c.bf16 %v662, %v661
    %v718 = vpack.c.bf16 %v664, %v663
    %v719 = vpack.c.bf16 %v666, %v665
    %v720 = vpack.c.bf16 %v668, %v667
    %v721 = vpack.c.bf16 %v670, %v669
    %v722 = vpack.c.bf16 %v672, %v671
    %v723 = vpack.c.bf16 %v674, %v673
    %v724 = vpack.c.bf16 %v676, %v675
    %v725 = vpack.c.bf16 %v678, %v677
    %v726 = vpack.c.bf16 %v680, %v679
    %v727 = vpack.c.bf16 %v682, %v681
    %v728 = vpack.c.bf16 %v684, %v683
    %v729 = vpack.c.bf16 %v686, %v685
    %v730 = vpack.c.bf16 %v688, %v687
    %v731 = vpack.c.bf16 %v690, %v689
    %v732 = vpack.c.bf16 %v692, %v691
    %v733 = vpack.c.bf16 %v694, %v693
    %v734 = vpack.c.bf16 %v696, %v695
    %v735 = vpack.c.bf16 %v698, %v697
    %v736 = vpack.c.bf16 %v700, %v699
    %v737 = vpack.c.bf16 %v702, %v701
    %v738 = vpack.c.bf16 %v704, %v703
    %v739 = vpack.c.bf16 %v706, %v705
    %v740 = vpack.c.bf16 %v708, %v707
    %v741 = vld [vmem:[%s2] sm:$0xff]
    %v742 = vld [vmem:[%s2 + $0x8] sm:$0xff]
    %v743 = vld [vmem:[%s2 + $0x10] sm:$0xff]
    %v744 = vld [vmem:[%s2 + $0x18] sm:$0xff]
    %v745 = vld [vmem:[%s2 + $0x20] sm:$0xff]
    %v746 = vld [vmem:[%s2 + $0x28] sm:$0xff]
    %v747 = vld [vmem:[%s2 + $0x30] sm:$0xff]
    %v748 = vld [vmem:[%s2 + $0x38] sm:$0xff]
    %v749 = vld [vmem:[%s2 + $0x40] sm:$0xff]
    %v750 = vld [vmem:[%s2 + $0x48] sm:$0xff]
    %v751 = vld [vmem:[%s2 + $0x50] sm:$0xff]
    %v752 = vld [vmem:[%s2 + $0x58] sm:$0xff]
    %v753 = vld [vmem:[%s2 + $0x60] sm:$0xff]
    %v754 = vld [vmem:[%s2 + $0x68] sm:$0xff]
    %v755 = vld [vmem:[%s2 + $0x70] sm:$0xff]
    %v756 = vld [vmem:[%s2 + $0x78] sm:$0xff]
    %v757 = vld [vmem:[%s2 + $0x80] sm:$0xff]
    %v758 = vld [vmem:[%s2 + $0x88] sm:$0xff]
    %v759 = vld [vmem:[%s2 + $0x90] sm:$0xff]
    %v760 = vld [vmem:[%s2 + $0x98] sm:$0xff]
    %v761 = vld [vmem:[%s2 + $0xa0] sm:$0xff]
    %v762 = vld [vmem:[%s2 + $0xa8] sm:$0xff]
    %v763 = vld [vmem:[%s2 + $0xb0] sm:$0xff]
    %v764 = vld [vmem:[%s2 + $0xb8] sm:$0xff]
    %v765 = vld [vmem:[%s2 + $0xc0] sm:$0xff]
    %v766 = vld [vmem:[%s2 + $0xc8] sm:$0xff]
    %v767 = vld [vmem:[%s2 + $0xd0] sm:$0xff]
    %v768 = vld [vmem:[%s2 + $0xd8] sm:$0xff]
    %v769 = vld [vmem:[%s2 + $0xe0] sm:$0xff]
    %v770 = vld [vmem:[%s2 + $0xe8] sm:$0xff]
    %v771 = vld [vmem:[%s2 + $0xf0] sm:$0xff]
    %v772 = vld [vmem:[%s2 + $0xf8] sm:$0xff]
    %v773 = vld [vmem:[%s2 + $0x100] sm:$0xff]
    %v774 = vld [vmem:[%s2 + $0x108] sm:$0xff]
    %v775 = vld [vmem:[%s2 + $0x110] sm:$0xff]
    %v776 = vld [vmem:[%s2 + $0x118] sm:$0xff]
    %v777 = vld [vmem:[%s2 + $0x120] sm:$0xff]
    %v778 = vld [vmem:[%s2 + $0x128] sm:$0xff]
    %v779 = vld [vmem:[%s2 + $0x130] sm:$0xff]
    %v780 = vld [vmem:[%s2 + $0x138] sm:$0xff]
    %v781 = vld [vmem:[%s2 + $0x140] sm:$0xff]
    %v782 = vld [vmem:[%s2 + $0x148] sm:$0xff]
    %v783 = vld [vmem:[%s2 + $0x150] sm:$0xff]
    %v784 = vld [vmem:[%s2 + $0x158] sm:$0xff]
    %v785 = vld [vmem:[%s2 + $0x160] sm:$0xff]
    %v786 = vld [vmem:[%s2 + $0x168] sm:$0xff]
    %v787 = vld [vmem:[%s2 + $0x170] sm:$0xff]
    %v788 = vld [vmem:[%s2 + $0x178] sm:$0xff]
    %v789 = vld [vmem:[%s2 + $0x180] sm:$0xff]
    %v790 = vld [vmem:[%s2 + $0x188] sm:$0xff]
    %v791 = vld [vmem:[%s2 + $0x190] sm:$0xff]
    %v792 = vld [vmem:[%s2 + $0x198] sm:$0xff]
    %v793 = vld [vmem:[%s2 + $0x1a0] sm:$0xff]
    %v794 = vld [vmem:[%s2 + $0x1a8] sm:$0xff]
    %v795 = vld [vmem:[%s2 + $0x1b0] sm:$0xff]
    %v796 = vld [vmem:[%s2 + $0x1b8] sm:$0xff]
    %v797 = vld [vmem:[%s2 + $0x1c0] sm:$0xff]
    %v798 = vld [vmem:[%s2 + $0x1c8] sm:$0xff]
    %v799 = vld [vmem:[%s2 + $0x1d0] sm:$0xff]
    %v800 = vld [vmem:[%s2 + $0x1d8] sm:$0xff]
    %v801 = vld [vmem:[%s2 + $0x1e0] sm:$0xff]
    %v802 = vld [vmem:[%s2 + $0x1e8] sm:$0xff]
    %v803 = vld [vmem:[%s2 + $0x1f0] sm:$0xff]
    %v804 = vld [vmem:[%s2 + $0x1f8] sm:$0xff]
    %v805 = vld [vmem:[%s3] sm:$0xff]
    %v806 = vld [vmem:[%s3 + $0x8] sm:$0xff]
    %v807 = vld [vmem:[%s3 + $0x10] sm:$0xff]
    %v808 = vld [vmem:[%s3 + $0x18] sm:$0xff]
    %v809 = vld [vmem:[%s3 + $0x20] sm:$0xff]
    %v810 = vld [vmem:[%s3 + $0x28] sm:$0xff]
    %v811 = vld [vmem:[%s3 + $0x30] sm:$0xff]
    %v812 = vld [vmem:[%s3 + $0x38] sm:$0xff]
    %v813 = vld [vmem:[%s3 + $0x40] sm:$0xff]
    %v814 = vld [vmem:[%s3 + $0x48] sm:$0xff]
    %v815 = vld [vmem:[%s3 + $0x50] sm:$0xff]
    %v816 = vld [vmem:[%s3 + $0x58] sm:$0xff]
    %v817 = vld [vmem:[%s3 + $0x60] sm:$0xff]
    %v818 = vld [vmem:[%s3 + $0x68] sm:$0xff]
    %v819 = vld [vmem:[%s3 + $0x70] sm:$0xff]
    %v820 = vld [vmem:[%s3 + $0x78] sm:$0xff]
    %v821 = vld [vmem:[%s3 + $0x80] sm:$0xff]
    %v822 = vld [vmem:[%s3 + $0x88] sm:$0xff]
    %v823 = vld [vmem:[%s3 + $0x90] sm:$0xff]
    %v824 = vld [vmem:[%s3 + $0x98] sm:$0xff]
    %v825 = vld [vmem:[%s3 + $0xa0] sm:$0xff]
    %v826 = vld [vmem:[%s3 + $0xa8] sm:$0xff]
    %v827 = vld [vmem:[%s3 + $0xb0] sm:$0xff]
    %v828 = vld [vmem:[%s3 + $0xb8] sm:$0xff]
    %v829 = vld [vmem:[%s3 + $0xc0] sm:$0xff]
    %v830 = vld [vmem:[%s3 + $0xc8] sm:$0xff]
    %v831 = vld [vmem:[%s3 + $0xd0] sm:$0xff]
    %v832 = vld [vmem:[%s3 + $0xd8] sm:$0xff]
    %v833 = vld [vmem:[%s3 + $0xe0] sm:$0xff]
    %v834 = vld [vmem:[%s3 + $0xe8] sm:$0xff]
    %v835 = vld [vmem:[%s3 + $0xf0] sm:$0xff]
    %v836 = vld [vmem:[%s3 + $0xf8] sm:$0xff]
    %838 = vset.pattern.permute.xlu0 0
    %839 = vperm.xlu0 %838, %v805
    %v840 = vpop.permute.xlu0 %839
    %843 = vset.pattern.permute.xlu0 0
    %844 = vperm.xlu0 %843, %v806
    %v845 = vpop.permute.xlu0 %844
    %848 = vset.pattern.permute.xlu0 0
    %849 = vperm.xlu0 %848, %v807
    %v850 = vpop.permute.xlu0 %849
    %853 = vset.pattern.permute.xlu0 0
    %854 = vperm.xlu0 %853, %v808
    %v855 = vpop.permute.xlu0 %854
    %858 = vset.pattern.permute.xlu0 0
    %859 = vperm.xlu0 %858, %v809
    %v860 = vpop.permute.xlu0 %859
    %863 = vset.pattern.permute.xlu0 0
    %864 = vperm.xlu0 %863, %v810
    %v865 = vpop.permute.xlu0 %864
    %868 = vset.pattern.permute.xlu0 0
    %869 = vperm.xlu0 %868, %v811
    %v870 = vpop.permute.xlu0 %869
    %873 = vset.pattern.permute.xlu0 0
    %874 = vperm.xlu0 %873, %v812
    %v875 = vpop.permute.xlu0 %874
    %878 = vset.pattern.permute.xlu0 0
    %879 = vperm.xlu0 %878, %v813
    %v880 = vpop.permute.xlu0 %879
    %883 = vset.pattern.permute.xlu0 0
    %884 = vperm.xlu0 %883, %v814
    %v885 = vpop.permute.xlu0 %884
    %888 = vset.pattern.permute.xlu0 0
    %889 = vperm.xlu0 %888, %v815
    %v890 = vpop.permute.xlu0 %889
    %893 = vset.pattern.permute.xlu0 0
    %894 = vperm.xlu0 %893, %v816
    %v895 = vpop.permute.xlu0 %894
    %898 = vset.pattern.permute.xlu0 0
    %899 = vperm.xlu0 %898, %v817
    %v900 = vpop.permute.xlu0 %899
    %903 = vset.pattern.permute.xlu0 0
    %904 = vperm.xlu0 %903, %v818
    %v905 = vpop.permute.xlu0 %904
    %908 = vset.pattern.permute.xlu0 0
    %909 = vperm.xlu0 %908, %v819
    %v910 = vpop.permute.xlu0 %909
    %913 = vset.pattern.permute.xlu0 0
    %914 = vperm.xlu0 %913, %v820
    %v915 = vpop.permute.xlu0 %914
    %918 = vset.pattern.permute.xlu0 0
    %919 = vperm.xlu0 %918, %v821
    %v920 = vpop.permute.xlu0 %919
    %923 = vset.pattern.permute.xlu0 0
    %924 = vperm.xlu0 %923, %v822
    %v925 = vpop.permute.xlu0 %924
    %928 = vset.pattern.permute.xlu0 0
    %929 = vperm.xlu0 %928, %v823
    %v930 = vpop.permute.xlu0 %929
    %933 = vset.pattern.permute.xlu0 0
    %934 = vperm.xlu0 %933, %v824
    %v935 = vpop.permute.xlu0 %934
    %938 = vset.pattern.permute.xlu0 0
    %939 = vperm.xlu0 %938, %v825
    %v940 = vpop.permute.xlu0 %939
    %943 = vset.pattern.permute.xlu0 0
    %944 = vperm.xlu0 %943, %v826
    %v945 = vpop.permute.xlu0 %944
    %948 = vset.pattern.permute.xlu0 0
    %949 = vperm.xlu0 %948, %v827
    %v950 = vpop.permute.xlu0 %949
    %953 = vset.pattern.permute.xlu0 0
    %954 = vperm.xlu0 %953, %v828
    %v955 = vpop.permute.xlu0 %954
    %958 = vset.pattern.permute.xlu0 0
    %959 = vperm.xlu0 %958, %v829
    %v960 = vpop.permute.xlu0 %959
    %963 = vset.pattern.permute.xlu0 0
    %964 = vperm.xlu0 %963, %v830
    %v965 = vpop.permute.xlu0 %964
    %968 = vset.pattern.permute.xlu0 0
    %969 = vperm.xlu0 %968, %v831
    %v970 = vpop.permute.xlu0 %969
    %973 = vset.pattern.permute.xlu0 0
    %974 = vperm.xlu0 %973, %v832
    %v975 = vpop.permute.xlu0 %974
    %978 = vset.pattern.permute.xlu0 0
    %979 = vperm.xlu0 %978, %v833
    %v980 = vpop.permute.xlu0 %979
    %983 = vset.pattern.permute.xlu0 0
    %984 = vperm.xlu0 %983, %v834
    %v985 = vpop.permute.xlu0 %984
    %988 = vset.pattern.permute.xlu0 0
    %989 = vperm.xlu0 %988, %v835
    %v990 = vpop.permute.xlu0 %989
    %993 = vset.pattern.permute.xlu0 0
    %994 = vperm.xlu0 %993, %v836
    %v995 = vpop.permute.xlu0 %994
    %v1061 = vunpack.c.l.b16 %v741
    %v1062 = vunpack.c.h.b16 %v741
    %v1063 = vunpack.c.l.b16 %v742
    %v1064 = vunpack.c.h.b16 %v742
    %v1065 = vunpack.c.l.b16 %v743
    %v1066 = vunpack.c.h.b16 %v743
    %v1067 = vunpack.c.l.b16 %v744
    %v1068 = vunpack.c.h.b16 %v744
    %v1069 = vunpack.c.l.b16 %v745
    %v1070 = vunpack.c.h.b16 %v745
    %v1071 = vunpack.c.l.b16 %v746
    %v1072 = vunpack.c.h.b16 %v746
    %v1073 = vunpack.c.l.b16 %v747
    %v1074 = vunpack.c.h.b16 %v747
    %v1075 = vunpack.c.l.b16 %v748
    %v1076 = vunpack.c.h.b16 %v748
    %v1077 = vunpack.c.l.b16 %v749
    %v1078 = vunpack.c.h.b16 %v749
    %v1079 = vunpack.c.l.b16 %v750
    %v1080 = vunpack.c.h.b16 %v750
    %v1081 = vunpack.c.l.b16 %v751
    %v1082 = vunpack.c.h.b16 %v751
    %v1083 = vunpack.c.l.b16 %v752
    %v1084 = vunpack.c.h.b16 %v752
    %v1085 = vunpack.c.l.b16 %v753
    %v1086 = vunpack.c.h.b16 %v753
    %v1087 = vunpack.c.l.b16 %v754
    %v1088 = vunpack.c.h.b16 %v754
    %v1089 = vunpack.c.l.b16 %v755
    %v1090 = vunpack.c.h.b16 %v755
    %v1091 = vunpack.c.l.b16 %v756
    %v1092 = vunpack.c.h.b16 %v756
    %v1093 = vunpack.c.l.b16 %v757
    %v1094 = vunpack.c.h.b16 %v757
    %v1095 = vunpack.c.l.b16 %v758
    %v1096 = vunpack.c.h.b16 %v758
    %v1097 = vunpack.c.l.b16 %v759
    %v1098 = vunpack.c.h.b16 %v759
    %v1099 = vunpack.c.l.b16 %v760
    %v1100 = vunpack.c.h.b16 %v760
    %v1101 = vunpack.c.l.b16 %v761
    %v1102 = vunpack.c.h.b16 %v761
    %v1103 = vunpack.c.l.b16 %v762
    %v1104 = vunpack.c.h.b16 %v762
    %v1105 = vunpack.c.l.b16 %v763
    %v1106 = vunpack.c.h.b16 %v763
    %v1107 = vunpack.c.l.b16 %v764
    %v1108 = vunpack.c.h.b16 %v764
    %v1109 = vunpack.c.l.b16 %v765
    %v1110 = vunpack.c.h.b16 %v765
    %v1111 = vunpack.c.l.b16 %v766
    %v1112 = vunpack.c.h.b16 %v766
    %v1113 = vunpack.c.l.b16 %v767
    %v1114 = vunpack.c.h.b16 %v767
    %v1115 = vunpack.c.l.b16 %v768
    %v1116 = vunpack.c.h.b16 %v768
    %v1117 = vunpack.c.l.b16 %v769
    %v1118 = vunpack.c.h.b16 %v769
    %v1119 = vunpack.c.l.b16 %v770
    %v1120 = vunpack.c.h.b16 %v770
    %v1121 = vunpack.c.l.b16 %v771
    %v1122 = vunpack.c.h.b16 %v771
    %v1123 = vunpack.c.l.b16 %v772
    %v1124 = vunpack.c.h.b16 %v772
    %v1125 = vunpack.c.l.b16 %v773
    %v1126 = vunpack.c.h.b16 %v773
    %v1127 = vunpack.c.l.b16 %v774
    %v1128 = vunpack.c.h.b16 %v774
    %v1129 = vunpack.c.l.b16 %v775
    %v1130 = vunpack.c.h.b16 %v775
    %v1131 = vunpack.c.l.b16 %v776
    %v1132 = vunpack.c.h.b16 %v776
    %v1133 = vunpack.c.l.b16 %v777
    %v1134 = vunpack.c.h.b16 %v777
    %v1135 = vunpack.c.l.b16 %v778
    %v1136 = vunpack.c.h.b16 %v778
    %v1137 = vunpack.c.l.b16 %v779
    %v1138 = vunpack.c.h.b16 %v779
    %v1139 = vunpack.c.l.b16 %v780
    %v1140 = vunpack.c.h.b16 %v780
    %v1141 = vunpack.c.l.b16 %v781
    %v1142 = vunpack.c.h.b16 %v781
    %v1143 = vunpack.c.l.b16 %v782
    %v1144 = vunpack.c.h.b16 %v782
    %v1145 = vunpack.c.l.b16 %v783
    %v1146 = vunpack.c.h.b16 %v783
    %v1147 = vunpack.c.l.b16 %v784
    %v1148 = vunpack.c.h.b16 %v784
    %v1149 = vunpack.c.l.b16 %v785
    %v1150 = vunpack.c.h.b16 %v785
    %v1151 = vunpack.c.l.b16 %v786
    %v1152 = vunpack.c.h.b16 %v786
    %v1153 = vunpack.c.l.b16 %v787
    %v1154 = vunpack.c.h.b16 %v787
    %v1155 = vunpack.c.l.b16 %v788
    %v1156 = vunpack.c.h.b16 %v788
    %v1157 = vunpack.c.l.b16 %v789
    %v1158 = vunpack.c.h.b16 %v789
    %v1159 = vunpack.c.l.b16 %v790
    %v1160 = vunpack.c.h.b16 %v790
    %v1161 = vunpack.c.l.b16 %v791
    %v1162 = vunpack.c.h.b16 %v791
    %v1163 = vunpack.c.l.b16 %v792
    %v1164 = vunpack.c.h.b16 %v792
    %v1165 = vunpack.c.l.b16 %v793
    %v1166 = vunpack.c.h.b16 %v793
    %v1167 = vunpack.c.l.b16 %v794
    %v1168 = vunpack.c.h.b16 %v794
    %v1169 = vunpack.c.l.b16 %v795
    %v1170 = vunpack.c.h.b16 %v795
    %v1171 = vunpack.c.l.b16 %v796
    %v1172 = vunpack.c.h.b16 %v796
    %v1173 = vunpack.c.l.b16 %v797
    %v1174 = vunpack.c.h.b16 %v797
    %v1175 = vunpack.c.l.b16 %v798
    %v1176 = vunpack.c.h.b16 %v798
    %v1177 = vunpack.c.l.b16 %v799
    %v1178 = vunpack.c.h.b16 %v799
    %v1179 = vunpack.c.l.b16 %v800
    %v1180 = vunpack.c.h.b16 %v800
    %v1181 = vunpack.c.l.b16 %v801
    %v1182 = vunpack.c.h.b16 %v801
    %v1183 = vunpack.c.l.b16 %v802
    %v1184 = vunpack.c.h.b16 %v802
    %v1185 = vunpack.c.l.b16 %v803
    %v1186 = vunpack.c.h.b16 %v803
    %v1187 = vunpack.c.l.b16 %v804
    %v1188 = vunpack.c.h.b16 %v804
    %v1189 = vpack.c.b16 %v1065, %v1061
    %v1190 = vpack.c.b16 %v1066, %v1062
    %v1191 = vpack.c.b16 %v1067, %v1063
    %v1192 = vpack.c.b16 %v1068, %v1064
    %v1193 = vpack.c.b16 %v1073, %v1069
    %v1194 = vpack.c.b16 %v1074, %v1070
    %v1195 = vpack.c.b16 %v1075, %v1071
    %v1196 = vpack.c.b16 %v1076, %v1072
    %v1197 = vpack.c.b16 %v1081, %v1077
    %v1198 = vpack.c.b16 %v1082, %v1078
    %v1199 = vpack.c.b16 %v1083, %v1079
    %v1200 = vpack.c.b16 %v1084, %v1080
    %v1201 = vpack.c.b16 %v1089, %v1085
    %v1202 = vpack.c.b16 %v1090, %v1086
    %v1203 = vpack.c.b16 %v1091, %v1087
    %v1204 = vpack.c.b16 %v1092, %v1088
    %v1205 = vpack.c.b16 %v1097, %v1093
    %v1206 = vpack.c.b16 %v1098, %v1094
    %v1207 = vpack.c.b16 %v1099, %v1095
    %v1208 = vpack.c.b16 %v1100, %v1096
    %v1209 = vpack.c.b16 %v1105, %v1101
    %v1210 = vpack.c.b16 %v1106, %v1102
    %v1211 = vpack.c.b16 %v1107, %v1103
    %v1212 = vpack.c.b16 %v1108, %v1104
    %v1213 = vpack.c.b16 %v1113, %v1109
    %v1214 = vpack.c.b16 %v1114, %v1110
    %v1215 = vpack.c.b16 %v1115, %v1111
    %v1216 = vpack.c.b16 %v1116, %v1112
    %v1217 = vpack.c.b16 %v1121, %v1117
    %v1218 = vpack.c.b16 %v1122, %v1118
    %v1219 = vpack.c.b16 %v1123, %v1119
    %v1220 = vpack.c.b16 %v1124, %v1120
    %v1221 = vpack.c.b16 %v1129, %v1125
    %v1222 = vpack.c.b16 %v1130, %v1126
    %v1223 = vpack.c.b16 %v1131, %v1127
    %v1224 = vpack.c.b16 %v1132, %v1128
    %v1225 = vpack.c.b16 %v1137, %v1133
    %v1226 = vpack.c.b16 %v1138, %v1134
    %v1227 = vpack.c.b16 %v1139, %v1135
    %v1228 = vpack.c.b16 %v1140, %v1136
    %v1229 = vpack.c.b16 %v1145, %v1141
    %v1230 = vpack.c.b16 %v1146, %v1142
    %v1231 = vpack.c.b16 %v1147, %v1143
    %v1232 = vpack.c.b16 %v1148, %v1144
    %v1233 = vpack.c.b16 %v1153, %v1149
    %v1234 = vpack.c.b16 %v1154, %v1150
    %v1235 = vpack.c.b16 %v1155, %v1151
    %v1236 = vpack.c.b16 %v1156, %v1152
    %v1237 = vpack.c.b16 %v1161, %v1157
    %v1238 = vpack.c.b16 %v1162, %v1158
    %v1239 = vpack.c.b16 %v1163, %v1159
    %v1240 = vpack.c.b16 %v1164, %v1160
    %v1241 = vpack.c.b16 %v1169, %v1165
    %v1242 = vpack.c.b16 %v1170, %v1166
    %v1243 = vpack.c.b16 %v1171, %v1167
    %v1244 = vpack.c.b16 %v1172, %v1168
    %v1245 = vpack.c.b16 %v1177, %v1173
    %v1246 = vpack.c.b16 %v1178, %v1174
    %v1247 = vpack.c.b16 %v1179, %v1175
    %v1248 = vpack.c.b16 %v1180, %v1176
    %v1249 = vpack.c.b16 %v1185, %v1181
    %v1250 = vpack.c.b16 %v1186, %v1182
    %v1251 = vpack.c.b16 %v1187, %v1183
    %v1252 = vpack.c.b16 %v1188, %v1184
    %1317 = vmatprep.subr.bf16.mxu0 0
    %1318 = vmatpush1.bf16.msra.mxu0 %v709
    %1319 = vmatprep.subr.bf16.mxu0 0
    %1320 = vmatpush1.bf16.msra.mxu0 %v710
    %1321 = vmatprep.subr.bf16.mxu0 0
    %1322 = vmatpush1.bf16.msra.mxu0 %v711
    %1323 = vmatprep.subr.bf16.mxu0 0
    %1324 = vmatpush1.bf16.msra.mxu0 %v712
    %1325 = vmatprep.subr.bf16.mxu0 0
    %1326 = vmatpush1.bf16.msra.mxu0 %v713
    %1327 = vmatprep.subr.bf16.mxu0 0
    %1328 = vmatpush1.bf16.msra.mxu0 %v714
    %1329 = vmatprep.subr.bf16.mxu0 0
    %1330 = vmatpush1.bf16.msra.mxu0 %v715
    %1331 = vmatprep.subr.bf16.mxu0 0
    %1332 = vmatpush1.bf16.msra.mxu0 %v716
    %1333 = vmatprep.subr.bf16.mxu0 0
    %1334 = vmatpush1.bf16.msra.mxu0 %v717
    %1335 = vmatprep.subr.bf16.mxu0 0
    %1336 = vmatpush1.bf16.msra.mxu0 %v718
    %1337 = vmatprep.subr.bf16.mxu0 0
    %1338 = vmatpush1.bf16.msra.mxu0 %v719
    %1339 = vmatprep.subr.bf16.mxu0 0
    %1340 = vmatpush1.bf16.msra.mxu0 %v720
    %1341 = vmatprep.subr.bf16.mxu0 0
    %1342 = vmatpush1.bf16.msra.mxu0 %v721
    %1343 = vmatprep.subr.bf16.mxu0 0
    %1344 = vmatpush1.bf16.msra.mxu0 %v722
    %1345 = vmatprep.subr.bf16.mxu0 0
    %1346 = vmatpush1.bf16.msra.mxu0 %v723
    %1347 = vmatprep.subr.bf16.mxu0 0
    %1348 = vmatpush1.bf16.msra.mxu0 %v724
    %1349 = vmatprep.mubr.bf16.mxu0 %v1190
    %1350 = vmatmul.mubr.bf16.gmra.mrb[0].mxu0 %v1189
    %v1351 = vpop.f32.mrb[0].mxu0
    %v1352 = vadd.f32 %v840, %v1351
    %v1353 = vpop.f32.mrb[0].mxu0
    %v1354 = vpop.f32.mrb[0].mxu0
    %v1355 = vadd.f32 %v845, %v1354
    %v1356 = vpop.f32.mrb[0].mxu0
    %1357 = vmatprep.mubr.bf16.mxu0 %v1194
    %1358 = vmatmul.mubr.bf16.gmra.mrb[0].mxu0 %v1193
    %v1359 = vpop.f32.mrb[0].mxu0
    %v1360 = vadd.f32 %v850, %v1359
    %v1361 = vpop.f32.mrb[0].mxu0
    %v1362 = vpop.f32.mrb[0].mxu0
    %v1363 = vadd.f32 %v855, %v1362
    %v1364 = vpop.f32.mrb[0].mxu0
    %1365 = vmatprep.mubr.bf16.mxu0 %v1198
    %1366 = vmatmul.mubr.bf16.gmra.mrb[0].mxu0 %v1197
    %v1367 = vpop.f32.mrb[0].mxu0
    %v1368 = vadd.f32 %v860, %v1367
    %v1369 = vpop.f32.mrb[0].mxu0
    %v1370 = vpop.f32.mrb[0].mxu0
    %v1371 = vadd.f32 %v865, %v1370
    %v1372 = vpop.f32.mrb[0].mxu0
    %1373 = vmatprep.mubr.bf16.mxu0 %v1202
    %1374 = vmatmul.mubr.bf16.gmra.mrb[0].mxu0 %v1201
    %v1375 = vpop.f32.mrb[0].mxu0
    %v1376 = vadd.f32 %v870, %v1375
    %v1377 = vpop.f32.mrb[0].mxu0
    %v1378 = vpop.f32.mrb[0].mxu0
    %v1379 = vadd.f32 %v875, %v1378
    %v1380 = vpop.f32.mrb[0].mxu0
    %1381 = vmatprep.mubr.bf16.mxu0 %v1206
    %1382 = vmatmul.mubr.bf16.gmra.mrb[0].mxu0 %v1205
    %v1383 = vpop.f32.mrb[0].mxu0
    %v1384 = vadd.f32 %v880, %v1383
    %v1385 = vpop.f32.mrb[0].mxu0
    %v1386 = vpop.f32.mrb[0].mxu0
    %v1387 = vadd.f32 %v885, %v1386
    %v1388 = vpop.f32.mrb[0].mxu0
    %1389 = vmatprep.mubr.bf16.mxu0 %v1210
    %1390 = vmatmul.mubr.bf16.gmra.mrb[0].mxu0 %v1209
    %v1391 = vpop.f32.mrb[0].mxu0
    %v1392 = vadd.f32 %v890, %v1391
    %v1393 = vpop.f32.mrb[0].mxu0
    %v1394 = vpop.f32.mrb[0].mxu0
    %v1395 = vadd.f32 %v895, %v1394
    %v1396 = vpop.f32.mrb[0].mxu0
    %1397 = vmatprep.mubr.bf16.mxu0 %v1214
    %1398 = vmatmul.mubr.bf16.gmra.mrb[0].mxu0 %v1213
    %v1399 = vpop.f32.mrb[0].mxu0
    %v1400 = vadd.f32 %v900, %v1399
    %v1401 = vpop.f32.mrb[0].mxu0
    %v1402 = vpop.f32.mrb[0].mxu0
    %v1403 = vadd.f32 %v905, %v1402
    %v1404 = vpop.f32.mrb[0].mxu0
    %1405 = vmatprep.mubr.bf16.mxu0 %v1218
    %1406 = vmatmul.mubr.bf16.gmra.mrb[0].mxu0 %v1217
    %v1407 = vpop.f32.mrb[0].mxu0
    %v1408 = vadd.f32 %v910, %v1407
    %v1409 = vpop.f32.mrb[0].mxu0
    %v1410 = vpop.f32.mrb[0].mxu0
    %v1411 = vadd.f32 %v915, %v1410
    %v1412 = vpop.f32.mrb[0].mxu0
    %1413 = vmatprep.mubr.bf16.mxu0 %v1222
    %1414 = vmatmul.mubr.bf16.gmra.mrb[0].mxu0 %v1221
    %v1415 = vpop.f32.mrb[0].mxu0
    %v1416 = vadd.f32 %v920, %v1415
    %v1417 = vpop.f32.mrb[0].mxu0
    %v1418 = vpop.f32.mrb[0].mxu0
    %v1419 = vadd.f32 %v925, %v1418
    %v1420 = vpop.f32.mrb[0].mxu0
    %1421 = vmatprep.mubr.bf16.mxu0 %v1226
    %1422 = vmatmul.mubr.bf16.gmra.mrb[0].mxu0 %v1225
    %v1423 = vpop.f32.mrb[0].mxu0
    %v1424 = vadd.f32 %v930, %v1423
    %v1425 = vpop.f32.mrb[0].mxu0
    %v1426 = vpop.f32.mrb[0].mxu0
    %v1427 = vadd.f32 %v935, %v1426
    %v1428 = vpop.f32.mrb[0].mxu0
    %1429 = vmatprep.mubr.bf16.mxu0 %v1230
    %1430 = vmatmul.mubr.bf16.gmra.mrb[0].mxu0 %v1229
    %v1431 = vpop.f32.mrb[0].mxu0
    %v1432 = vadd.f32 %v940, %v1431
    %v1433 = vpop.f32.mrb[0].mxu0
    %v1434 = vpop.f32.mrb[0].mxu0
    %v1435 = vadd.f32 %v945, %v1434
    %v1436 = vpop.f32.mrb[0].mxu0
    %1437 = vmatprep.mubr.bf16.mxu0 %v1234
    %1438 = vmatmul.mubr.bf16.gmra.mrb[0].mxu0 %v1233
    %v1439 = vpop.f32.mrb[0].mxu0
    %v1440 = vadd.f32 %v950, %v1439
    %v1441 = vpop.f32.mrb[0].mxu0
    %v1442 = vpop.f32.mrb[0].mxu0
    %v1443 = vadd.f32 %v955, %v1442
    %v1444 = vpop.f32.mrb[0].mxu0
    %1445 = vmatprep.mubr.bf16.mxu0 %v1238
    %1446 = vmatmul.mubr.bf16.gmra.mrb[0].mxu0 %v1237
    %v1447 = vpop.f32.mrb[0].mxu0
    %v1448 = vadd.f32 %v960, %v1447
    %v1449 = vpop.f32.mrb[0].mxu0
    %v1450 = vpop.f32.mrb[0].mxu0
    %v1451 = vadd.f32 %v965, %v1450
    %v1452 = vpop.f32.mrb[0].mxu0
    %1453 = vmatprep.mubr.bf16.mxu0 %v1242
    %1454 = vmatmul.mubr.bf16.gmra.mrb[0].mxu0 %v1241
    %v1455 = vpop.f32.mrb[0].mxu0
    %v1456 = vadd.f32 %v970, %v1455
    %v1457 = vpop.f32.mrb[0].mxu0
    %v1458 = vpop.f32.mrb[0].mxu0
    %v1459 = vadd.f32 %v975, %v1458
    %v1460 = vpop.f32.mrb[0].mxu0
    %1461 = vmatprep.mubr.bf16.mxu0 %v1246
    %1462 = vmatmul.mubr.bf16.gmra.mrb[0].mxu0 %v1245
    %v1463 = vpop.f32.mrb[0].mxu0
    %v1464 = vadd.f32 %v980, %v1463
    %v1465 = vpop.f32.mrb[0].mxu0
    %v1466 = vpop.f32.mrb[0].mxu0
    %v1467 = vadd.f32 %v985, %v1466
    %v1468 = vpop.f32.mrb[0].mxu0
    %1469 = vmatprep.mubr.bf16.mxu0 %v1250
    %1470 = vmatmul.mubr.bf16.gmra.mrb[0].mxu0 %v1249
    %v1471 = vpop.f32.mrb[0].mxu0
    %v1472 = vadd.f32 %v990, %v1471
    %v1473 = vpop.f32.mrb[0].mxu0
    %v1474 = vpop.f32.mrb[0].mxu0
    %v1475 = vadd.f32 %v995, %v1474
    %v1476 = vpop.f32.mrb[0].mxu0
    %1477 = vdwg.mxu0
    %1478 = vmatprep.subr.bf16.mxu0 0
    %1479 = vmatpush1.bf16.msra.mxu0 %v725
    %1480 = vmatprep.subr.bf16.mxu0 0
    %1481 = vmatpush1.bf16.msra.mxu0 %v726
    %1482 = vmatprep.subr.bf16.mxu0 0
    %1483 = vmatpush1.bf16.msra.mxu0 %v727
    %1484 = vmatprep.subr.bf16.mxu0 0
    %1485 = vmatpush1.bf16.msra.mxu0 %v728
    %1486 = vmatprep.subr.bf16.mxu0 0
    %1487 = vmatpush1.bf16.msra.mxu0 %v729
    %1488 = vmatprep.subr.bf16.mxu0 0
    %1489 = vmatpush1.bf16.msra.mxu0 %v730
    %1490 = vmatprep.subr.bf16.mxu0 0
    %1491 = vmatpush1.bf16.msra.mxu0 %v731
    %1492 = vmatprep.subr.bf16.mxu0 0
    %1493 = vmatpush1.bf16.msra.mxu0 %v732
    %1494 = vmatprep.subr.bf16.mxu0 0
    %1495 = vmatpush1.bf16.msra.mxu0 %v733
    %1496 = vmatprep.subr.bf16.mxu0 0
    %1497 = vmatpush1.bf16.msra.mxu0 %v734
    %1498 = vmatprep.subr.bf16.mxu0 0
    %1499 = vmatpush1.bf16.msra.mxu0 %v735
    %1500 = vmatprep.subr.bf16.mxu0 0
    %1501 = vmatpush1.bf16.msra.mxu0 %v736
    %1502 = vmatprep.subr.bf16.mxu0 0
    %1503 = vmatpush1.bf16.msra.mxu0 %v737
    %1504 = vmatprep.subr.bf16.mxu0 0
    %1505 = vmatpush1.bf16.msra.mxu0 %v738
    %1506 = vmatprep.subr.bf16.mxu0 0
    %1507 = vmatpush1.bf16.msra.mxu0 %v739
    %1508 = vmatprep.subr.bf16.mxu0 0
    %1509 = vmatpush1.bf16.msra.mxu0 %v740
    %1510 = vmatprep.mubr.bf16.mxu0 %v1192
    %1511 = vmatmul.mubr.bf16.gmra.mrb[0].mxu0 %v1191
    %v1512 = vpop.f32.mrb[0].mxu0
    %v1513 = vadd.f32 %v1352, %v1512
    %v1514 = vpop.f32.mrb[0].mxu0
    %v1515 = vpop.f32.mrb[0].mxu0
    %v1516 = vadd.f32 %v1355, %v1515
    %v1517 = vpop.f32.mrb[0].mxu0
    %1518 = vmatprep.mubr.bf16.mxu0 %v1196
    %1519 = vmatmul.mubr.bf16.gmra.mrb[0].mxu0 %v1195
    %v1520 = vpop.f32.mrb[0].mxu0
    %v1521 = vadd.f32 %v1360, %v1520
    %v1522 = vpop.f32.mrb[0].mxu0
    %v1523 = vpop.f32.mrb[0].mxu0
    %v1524 = vadd.f32 %v1363, %v1523
    %v1525 = vpop.f32.mrb[0].mxu0
    %1526 = vmatprep.mubr.bf16.mxu0 %v1200
    %1527 = vmatmul.mubr.bf16.gmra.mrb[0].mxu0 %v1199
    %v1528 = vpop.f32.mrb[0].mxu0
    %v1529 = vadd.f32 %v1368, %v1528
    %v1530 = vpop.f32.mrb[0].mxu0
    %v1531 = vpop.f32.mrb[0].mxu0
    %v1532 = vadd.f32 %v1371, %v1531
    %v1533 = vpop.f32.mrb[0].mxu0
    %1534 = vmatprep.mubr.bf16.mxu0 %v1204
    %1535 = vmatmul.mubr.bf16.gmra.mrb[0].mxu0 %v1203
    %v1536 = vpop.f32.mrb[0].mxu0
    %v1537 = vadd.f32 %v1376, %v1536
    %v1538 = vpop.f32.mrb[0].mxu0
    %v1539 = vpop.f32.mrb[0].mxu0
    %v1540 = vadd.f32 %v1379, %v1539
    %v1541 = vpop.f32.mrb[0].mxu0
    %1542 = vmatprep.mubr.bf16.mxu0 %v1208
    %1543 = vmatmul.mubr.bf16.gmra.mrb[0].mxu0 %v1207
    %v1544 = vpop.f32.mrb[0].mxu0
    %v1545 = vadd.f32 %v1384, %v1544
    %v1546 = vpop.f32.mrb[0].mxu0
    %v1547 = vpop.f32.mrb[0].mxu0
    %v1548 = vadd.f32 %v1387, %v1547
    %v1549 = vpop.f32.mrb[0].mxu0
    %1550 = vmatprep.mubr.bf16.mxu0 %v1212
    %1551 = vmatmul.mubr.bf16.gmra.mrb[0].mxu0 %v1211
    %v1552 = vpop.f32.mrb[0].mxu0
    %v1553 = vadd.f32 %v1392, %v1552
    %v1554 = vpop.f32.mrb[0].mxu0
    %v1555 = vpop.f32.mrb[0].mxu0
    %v1556 = vadd.f32 %v1395, %v1555
    %v1557 = vpop.f32.mrb[0].mxu0
    %1558 = vmatprep.mubr.bf16.mxu0 %v1216
    %1559 = vmatmul.mubr.bf16.gmra.mrb[0].mxu0 %v1215
    %v1560 = vpop.f32.mrb[0].mxu0
    %v1561 = vadd.f32 %v1400, %v1560
    %v1562 = vpop.f32.mrb[0].mxu0
    %v1563 = vpop.f32.mrb[0].mxu0
    %v1564 = vadd.f32 %v1403, %v1563
    %v1565 = vpop.f32.mrb[0].mxu0
    %1566 = vmatprep.mubr.bf16.mxu0 %v1220
    %1567 = vmatmul.mubr.bf16.gmra.mrb[0].mxu0 %v1219
    %v1568 = vpop.f32.mrb[0].mxu0
    %v1569 = vadd.f32 %v1408, %v1568
    %v1570 = vpop.f32.mrb[0].mxu0
    %v1571 = vpop.f32.mrb[0].mxu0
    %v1572 = vadd.f32 %v1411, %v1571
    %v1573 = vpop.f32.mrb[0].mxu0
    %1574 = vmatprep.mubr.bf16.mxu0 %v1224
    %1575 = vmatmul.mubr.bf16.gmra.mrb[0].mxu0 %v1223
    %v1576 = vpop.f32.mrb[0].mxu0
    %v1577 = vadd.f32 %v1416, %v1576
    %v1578 = vpop.f32.mrb[0].mxu0
    %v1579 = vpop.f32.mrb[0].mxu0
    %v1580 = vadd.f32 %v1419, %v1579
    %v1581 = vpop.f32.mrb[0].mxu0
    %1582 = vmatprep.mubr.bf16.mxu0 %v1228
    %1583 = vmatmul.mubr.bf16.gmra.mrb[0].mxu0 %v1227
    %v1584 = vpop.f32.mrb[0].mxu0
    %v1585 = vadd.f32 %v1424, %v1584
    %v1586 = vpop.f32.mrb[0].mxu0
    %v1587 = vpop.f32.mrb[0].mxu0
    %v1588 = vadd.f32 %v1427, %v1587
    %v1589 = vpop.f32.mrb[0].mxu0
    %1590 = vmatprep.mubr.bf16.mxu0 %v1232
    %1591 = vmatmul.mubr.bf16.gmra.mrb[0].mxu0 %v1231
    %v1592 = vpop.f32.mrb[0].mxu0
    %v1593 = vadd.f32 %v1432, %v1592
    %v1594 = vpop.f32.mrb[0].mxu0
    %v1595 = vpop.f32.mrb[0].mxu0
    %v1596 = vadd.f32 %v1435, %v1595
    %v1597 = vpop.f32.mrb[0].mxu0
    %1598 = vmatprep.mubr.bf16.mxu0 %v1236
    %1599 = vmatmul.mubr.bf16.gmra.mrb[0].mxu0 %v1235
    %v1600 = vpop.f32.mrb[0].mxu0
    %v1601 = vadd.f32 %v1440, %v1600
    %v1602 = vpop.f32.mrb[0].mxu0
    %v1603 = vpop.f32.mrb[0].mxu0
    %v1604 = vadd.f32 %v1443, %v1603
    %v1605 = vpop.f32.mrb[0].mxu0
    %1606 = vmatprep.mubr.bf16.mxu0 %v1240
    %1607 = vmatmul.mubr.bf16.gmra.mrb[0].mxu0 %v1239
    %v1608 = vpop.f32.mrb[0].mxu0
    %v1609 = vadd.f32 %v1448, %v1608
    %v1610 = vpop.f32.mrb[0].mxu0
    %v1611 = vpop.f32.mrb[0].mxu0
    %v1612 = vadd.f32 %v1451, %v1611
    %v1613 = vpop.f32.mrb[0].mxu0
    %1614 = vmatprep.mubr.bf16.mxu0 %v1244
    %1615 = vmatmul.mubr.bf16.gmra.mrb[0].mxu0 %v1243
    %v1616 = vpop.f32.mrb[0].mxu0
    %v1617 = vadd.f32 %v1456, %v1616
    %v1618 = vpop.f32.mrb[0].mxu0
    %v1619 = vpop.f32.mrb[0].mxu0
    %v1620 = vadd.f32 %v1459, %v1619
    %v1621 = vpop.f32.mrb[0].mxu0
    %1622 = vmatprep.mubr.bf16.mxu0 %v1248
    %1623 = vmatmul.mubr.bf16.gmra.mrb[0].mxu0 %v1247
    %v1624 = vpop.f32.mrb[0].mxu0
    %v1625 = vadd.f32 %v1464, %v1624
    %v1626 = vpop.f32.mrb[0].mxu0
    %v1627 = vpop.f32.mrb[0].mxu0
    %v1628 = vadd.f32 %v1467, %v1627
    %v1629 = vpop.f32.mrb[0].mxu0
    %1630 = vmatprep.mubr.bf16.mxu0 %v1252
    %1631 = vmatmul.mubr.bf16.gmra.mrb[0].mxu0 %v1251
    %v1632 = vpop.f32.mrb[0].mxu0
    %v1633 = vadd.f32 %v1472, %v1632
    %v1634 = vpop.f32.mrb[0].mxu0
    %v1635 = vpop.f32.mrb[0].mxu0
    %v1636 = vadd.f32 %v1475, %v1635
    %v1637 = vpop.f32.mrb[0].mxu0
    %1638 = vdwg.mxu0
    %v1639 = vmax.f32 %v1513, 0.0
    %v1640 = vmax.f32 %v1516, 0.0
    %v1641 = vmax.f32 %v1521, 0.0
    %v1642 = vmax.f32 %v1524, 0.0
    %v1643 = vmax.f32 %v1529, 0.0
    %v1644 = vmax.f32 %v1532, 0.0
    %v1645 = vmax.f32 %v1537, 0.0
    %v1646 = vmax.f32 %v1540, 0.0
    %v1647 = vmax.f32 %v1545, 0.0
    %v1648 = vmax.f32 %v1548, 0.0
    %v1649 = vmax.f32 %v1553, 0.0
    %v1650 = vmax.f32 %v1556, 0.0
    %v1651 = vmax.f32 %v1561, 0.0
    %v1652 = vmax.f32 %v1564, 0.0
    %v1653 = vmax.f32 %v1569, 0.0
    %v1654 = vmax.f32 %v1572, 0.0
    %v1655 = vmax.f32 %v1577, 0.0
    %v1656 = vmax.f32 %v1580, 0.0
    %v1657 = vmax.f32 %v1585, 0.0
    %v1658 = vmax.f32 %v1588, 0.0
    %v1659 = vmax.f32 %v1593, 0.0
    %v1660 = vmax.f32 %v1596, 0.0
    %v1661 = vmax.f32 %v1601, 0.0
    %v1662 = vmax.f32 %v1604, 0.0
    %v1663 = vmax.f32 %v1609, 0.0
    %v1664 = vmax.f32 %v1612, 0.0
    %v1665 = vmax.f32 %v1617, 0.0
    %v1666 = vmax.f32 %v1620, 0.0
    %v1667 = vmax.f32 %v1625, 0.0
    %v1668 = vmax.f32 %v1628, 0.0
    %v1669 = vmax.f32 %v1633, 0.0
    %v1670 = vmax.f32 %v1636, 0.0
    %v1671 = vpack.c.bf16 %v1640, %v1639
    %v1672 = vpack.c.bf16 %v1642, %v1641
    %v1673 = vpack.c.bf16 %v1644, %v1643
    %v1674 = vpack.c.bf16 %v1646, %v1645
    %v1675 = vpack.c.bf16 %v1648, %v1647
    %v1676 = vpack.c.bf16 %v1650, %v1649
    %v1677 = vpack.c.bf16 %v1652, %v1651
    %v1678 = vpack.c.bf16 %v1654, %v1653
    %v1679 = vpack.c.bf16 %v1656, %v1655
    %v1680 = vpack.c.bf16 %v1658, %v1657
    %v1681 = vpack.c.bf16 %v1660, %v1659
    %v1682 = vpack.c.bf16 %v1662, %v1661
    %v1683 = vpack.c.bf16 %v1664, %v1663
    %v1684 = vpack.c.bf16 %v1666, %v1665
    %v1685 = vpack.c.bf16 %v1668, %v1667
    %v1686 = vpack.c.bf16 %v1670, %v1669
    %v1687 = vld [vmem:[%s4] sm:$0x3]
    %v1688 = vld [vmem:[#allocation2] sm:$0x1]
    %1690 = vset.pattern.permute.xlu0 0
    %1691 = vperm.xlu0 %1690, %v1688
    %v1692 = vpop.permute.xlu0 %1691
    %v1694 = vlaneseq
    %v1695 = vshrl.u32 %v1694, 7
    %v1696 = vsub.s32 0, %v1695
    %v1697 = vrot.slane %v1692, %v1696
    %v1700 = vunpack.c.l.s4 1966171168
    %v1701 = vunpack.c.0.s8 %v1700
    %v1702 = vlaneseq
    %v1703 = vshrl.u32 %v1702, 7
    %v1704 = vsub.s32 %v1701, %v1703
    %v1705 = vrot.slane %v1687, %v1704
    %v1706 = vcombine.high %v1705, %v1705
    %v1708 = vunpack.c.l.s4 1966171168
    %v1709 = vunpack.c.0.s8 %v1708
    %v1710 = vlaneseq
    %v1711 = vshrl.u32 %v1710, 7
    %v1712 = vsub.s32 %v1709, %v1711
    %v1713 = vrot.slane %v1705, %v1712
    %v1715 = vunpack.c.l.s4 1966171168
    %v1716 = vunpack.c.0.s8 %v1715
    %v1717 = vlaneseq
    %v1718 = vshrl.u32 %v1717, 7
    %v1719 = vsub.s32 %v1716, %v1718
    %v1720 = vrot.slane %v1706, %v1719
    %1723 = vmatprep.subr.bf16.mxu0 0
    %1724 = vmatpush1.bf16.msra.mxu0 %v1671
    %1725 = vmatprep.subr.bf16.mxu0 0
    %1726 = vmatpush1.bf16.msra.mxu0 %v1672
    %1727 = vmatprep.subr.bf16.mxu0 0
    %1728 = vmatpush1.bf16.msra.mxu0 %v1673
    %1729 = vmatprep.subr.bf16.mxu0 0
    %1730 = vmatpush1.bf16.msra.mxu0 %v1674
    %1731 = vmatprep.subr.bf16.mxu0 0
    %1732 = vmatpush1.bf16.msra.mxu0 %v1675
    %1733 = vmatprep.subr.bf16.mxu0 0
    %1734 = vmatpush1.bf16.msra.mxu0 %v1676
    %1735 = vmatprep.subr.bf16.mxu0 0
    %1736 = vmatpush1.bf16.msra.mxu0 %v1677
    %1737 = vmatprep.subr.bf16.mxu0 0
    %1738 = vmatpush1.bf16.msra.mxu0 %v1678
    %1739 = vmatprep.subr.bf16.mxu0 0
    %1740 = vmatpush1.bf16.msra.mxu0 %v1679
    %1741 = vmatprep.subr.bf16.mxu0 0
    %1742 = vmatpush1.bf16.msra.mxu0 %v1680
    %1743 = vmatprep.subr.bf16.mxu0 0
    %1744 = vmatpush1.bf16.msra.mxu0 %v1681
    %1745 = vmatprep.subr.bf16.mxu0 0
    %1746 = vmatpush1.bf16.msra.mxu0 %v1682
    %1747 = vmatprep.subr.bf16.mxu0 0
    %1748 = vmatpush1.bf16.msra.mxu0 %v1683
    %1749 = vmatprep.subr.bf16.mxu0 0
    %1750 = vmatpush1.bf16.msra.mxu0 %v1684
    %1751 = vmatprep.subr.bf16.mxu0 0
    %1752 = vmatpush1.bf16.msra.mxu0 %v1685
    %1753 = vmatprep.subr.bf16.mxu0 0
    %1754 = vmatpush1.bf16.msra.mxu0 %v1686
    %1755 = vmatprep.mubr.bf16.mxu0 %v1720
    %1756 = vmatmul.mubr.bf16.gmra.mrb[0].mxu0 %v1713
    %v1757 = vpop.f32.mrb[0].mxu0
    %v1758 = vadd.f32 %v1697, %v1757
    %v1759 = vpop.f32.mrb[0].mxu0
    %v1760 = vpop.f32.mrb[0].mxu0
    %v1761 = vpop.f32.mrb[0].mxu0
    %1762 = vdwg.mxu0
    %vm1763 = vcmask 57344
    %1764 = vst.msk [vmem:[#allocation3] sm:$0x1] %vm1763, %v1758
    // Predicated region
    $region26: #{tpu_custom_call.1} parent=1 // pred_check
      _
    $region27: #{tpu_custom_call.1} parent=1 // pred_check_branch
      %1766 = sbr.rel (0) target = $region29
    $region28: #{tpu_custom_call.1} parent=1 // pred_region
      %s1768 = ssub.s32 16, 16
      %1769 = vsyncadd [#allocation4], %s1768
      %s1771 = sshll.u32 [#allocation3], 4
      %s1772 = int_to_ptr.vmem [resolvable:$true] %s1771
      %1774 = dma.vmem_to_hbm [thread:$0]  %s1772, 16, %s6, [#allocation4]
    $region29: #{tpu_custom_call.1} parent=1 // pred_fallthru
      _
    // Predicated region
    $region30: #{tpu_custom_call.1} parent=1 // pred_check
      _
    $region31: #{tpu_custom_call.1} parent=1 // pred_check_branch
      %1776 = sbr.rel (0) target = $region33
    $region32: #{tpu_custom_call.1} parent=1 // pred_region
      %1777 = dma.done [#allocation4], 16
    $region33: #{tpu_custom_call.1} parent=1 // pred_fallthru
      _
    %1778 = vsyncpa [#allocation4], 1

</llo_original>
